<compile_context>
chip_gen: v5e
topology: v5e:2x2
jax: 0.10.0
libtpu: 0.0.40
codegen_flags: <defaults>
</compile_context>

<pallas_src>
import functools
import numpy as np
import jax
import jax.numpy as jnp
from jax.experimental import pallas as pl
from jax.experimental.pallas import tpu as pltpu


# ----------------------------------------------------------------------------
# Fused kernel: one grid step == one encoder layer applied to one batch block.
# Grid = (num_batch_blocks ["parallel"], num_layers ["arbitrary"]).
# ----------------------------------------------------------------------------
def fused_encoder_kernel(
    x_ref,                                   # (Bblk, S, D) input (read at layer 0)
    wq_ref, wk_ref, wv_ref, wo_ref,          # (1, D, D)   current layer weights
    w1_ref,                                  # (1, D, 4D)
    w2_ref,                                  # (1, 4D, D)
    b1_ref,                                  # (1, 1, 4D)
    vec_ref,                                 # (1, 9, D)   packed: bq,bk,bv,bo,b2,ln1w,ln1b,ln2w,ln2b
    *out_refs,                               # y_ref (Bblk,S,D) [, attn_ref (1,Bblk,S,S)]
    nhead, need_weights, matmul_dtype,
):
    if need_weights:
        y_ref, attn_ref = out_refs
    else:
        (y_ref,) = out_refs
        attn_ref = None

    layer = pl.program_id(1)
    B, S, D = y_ref.shape                    # B here is the batch *block*
    H = nhead
    Dh = D // H
    R = B * S
    scale = 1.0 / float(np.sqrt(Dh))
    eps = 1e-5
    cd = matmul_dtype

    # Seed the VMEM-resident activation carry at layer 0 of this batch block.
    # (Output windows are write-only: the input alias reuses HBM, not VMEM.)
    @pl.when(layer == 0)
    def _():
        y_ref[...] = x_ref[...]

    x = y_ref[...].reshape(R, D)             # row-flattened activations (B*S, D)

    # Packed per-layer vectors (kept in f32).
    vec = vec_ref[0]                          # (9, D)
    bq, bk, bv = vec[0:1], vec[1:2], vec[2:3]
    bo, b2 = vec[3:4], vec[4:5]
    ln1w, ln1b = vec[5:6], vec[6:7]
    ln2w, ln2b = vec[7:8], vec[8:9]

    def mm(a, b):                             # MXU matmul, f32 accumulation
        return jnp.dot(a.astype(cd), b.astype(cd), preferred_element_type=jnp.float32)

    # ---- QKV projections (1/sqrt(Dh) folded into q) --------------------------
    q = (mm(x, wq_ref[0]) + bq) * scale
    k = mm(x, wk_ref[0]) + bk
    v = mm(x, wv_ref[0]) + bv

    # ---- attention: heads folded into the einsum batch dim -------------------
    def to_head_batch(t):                     # (R, D) -> (H*B, S, Dh)
        return jnp.concatenate(
            [t[:, h * Dh:(h + 1) * Dh].reshape(B, S, Dh) for h in range(H)], axis=0)

    qhb, khb, vhb = to_head_batch(q), to_head_batch(k), to_head_batch(v)

    s = jnp.einsum("bqd,bkd->bqk", qhb.astype(cd), khb.astype(cd),
                   preferred_element_type=jnp.float32)               # (H*B, S, S)
    s = s - jnp.max(s, axis=-1, keepdims=True)
    e = jnp.exp(s)
    denom = jnp.sum(e, axis=-1, keepdims=True)
    r = pl.reciprocal(denom, approx=True)                            # EUP slot
    r = r * (2.0 - denom * r)                 # one Newton step -> near-exact softmax
    p = e * r

    if need_weights:
        # Head-averaged attention weights, written once per (layer, batch block).
        attn_ref[0] = jnp.mean(p.reshape(H, B, S, S), axis=0)        # (B, S, S)

    ctx_hb = jnp.einsum("bqk,bkd->bqd", p.astype(cd), vhb.astype(cd),
                        preferred_element_type=jnp.float32)          # (H*B, S, Dh)
    ctx = jnp.concatenate(
        [ctx_hb[h * B:(h + 1) * B].reshape(R, Dh) for h in range(H)], axis=-1)  # (R, D)

    # ---- output projection + residual + LayerNorm 1 ---------------------------
    src = x + mm(ctx, wo_ref[0]) + bo
    mu = jnp.mean(src, axis=-1, keepdims=True)
    var = jnp.mean(jnp.square(src - mu), axis=-1, keepdims=True)
    src = (src - mu) * jax.lax.rsqrt(var + eps) * ln1w + ln1b

    # ---- feed-forward (relu) + residual + LayerNorm 2 --------------------------
    hid = jnp.maximum(mm(src, w1_ref[0]) + b1_ref[0], 0.0)
    src2 = src + mm(hid, w2_ref[0]) + b2
    mu = jnp.mean(src2, axis=-1, keepdims=True)
    var = jnp.mean(jnp.square(src2 - mu), axis=-1, keepdims=True)
    out = (src2 - mu) * jax.lax.rsqrt(var + eps) * ln2w + ln2b

    y_ref[...] = out.reshape(B, S, D)         # update the VMEM-resident carry


# ----------------------------------------------------------------------------
# Wrapper: one pallas_call for the whole encoder stack.
# ----------------------------------------------------------------------------
def multi_transformer_encoder(src, params, nhead, *, need_weights=True,
                              matmul_dtype=jnp.bfloat16, batch_block=None):
    # src: (S, B, D) -- PyTorch batch_first=False layout.
    S, B, D = src.shape
    L = len(params)
    Dff = params[0]["w1"].shape[1]
    Bblk = B if batch_block is None else batch_block
    assert B % Bblk == 0
    NB = B // Bblk

    # Single transpose for the entire fused stack; transposed back at the end.
    x = jnp.transpose(src, (1, 0, 2)).astype(jnp.float32)            # (B, S, D)

    # Stacked per-layer weights; matmul weights stored in matmul_dtype (bf16 by
    # default -> halves the per-layer HBM weight stream and its VMEM buffers).
    stack = lambda name, dt=jnp.float32: jnp.stack(
        [p[name].astype(dt) for p in params], axis=0)
    wd = matmul_dtype
    wq, wk, wv, wo = stack("wq", wd), stack("wk", wd), stack("wv", wd), stack("wo", wd)
    w1, w2 = stack("w1", wd), stack("w2", wd)
    b1 = stack("b1")                                                   # (L, 1, Dff)
    vecD = jnp.concatenate(                                            # (L, 9, D)
        [stack(n) for n in ("bq", "bk", "bv", "bo", "b2",
                            "ln1w", "ln1b", "ln2w", "ln2b")], axis=1)

    def wspec(d0, d1):
        # Stream one layer's tensor per layer step; only the active layer's
        # block (+ the prefetch double buffer) is resident in VMEM.
        return pl.BlockSpec((1, d0, d1), lambda b, l: (l, 0, 0))

    in_specs = [
        pl.BlockSpec((Bblk, S, D), lambda b, l: (b, 0, 0)),            # x (per batch block)
        wspec(D, D), wspec(D, D), wspec(D, D), wspec(D, D),            # wq wk wv wo
        wspec(D, Dff), wspec(Dff, D),                                  # w1 w2
        wspec(1, Dff),                                                 # b1
        wspec(9, D),                                                   # packed vectors
    ]

    out_specs = [pl.BlockSpec((Bblk, S, D), lambda b, l: (b, 0, 0))]   # y: VMEM carry
    out_shape = [jax.ShapeDtypeStruct((B, S, D), jnp.float32)]
    if need_weights:
        # NOTE: at real S make this lane-dense (pad S to a 128 multiple / bf16).
        out_specs.append(pl.BlockSpec((1, Bblk, S, S), lambda b, l: (l, b, 0, 0)))
        out_shape.append(jax.ShapeDtypeStruct((L, B, S, S), jnp.float32))

    grid_spec = pltpu.PrefetchScalarGridSpec(
        num_scalar_prefetch=0,
        grid=(NB, L),                          # batch blocks (parallel) x layers (carry)
        in_specs=in_specs,
        out_specs=tuple(out_specs),
    )

    outs = pl.pallas_call(
        functools.partial(fused_encoder_kernel, nhead=nhead,
                          need_weights=need_weights, matmul_dtype=matmul_dtype),
        out_shape=tuple(out_shape),
        grid_spec=grid_spec,
        input_output_aliases={0: 0},           # x aliases the y output HBM buffer
        compiler_params=pltpu.CompilerParams(
            dimension_semantics=("parallel", "arbitrary"),
            vmem_limit_bytes=48 * 1024 * 1024,  # fits v7x's 64 MiB with headroom
        ),
    )(x, wq, wk, wv, wo, w1, w2, b1, vecD)

    if need_weights:
        y, attn = outs
        attn_list = [attn[l] for l in range(L)]  # list of (B, S, S), matches PyTorch
    else:
        y = outs[0] if isinstance(outs, (tuple, list)) else outs
        attn_list = None

    return jnp.transpose(y, (1, 0, 2)), attn_list  # back to (S, B, D)


# ----------------------------------------------------------------------------
# Pure-JAX reference (same math) for a correctness check.
# ----------------------------------------------------------------------------
def ref_layer(x, p, nhead):
    B, S, D = x.shape
    Dh = D // nhead
    scale = 1.0 / np.sqrt(Dh)
    eps = 1e-5
    q = x @ p["wq"] + p["bq"]
    k = x @ p["wk"] + p["bk"]
    v = x @ p["wv"] + p["bv"]
    qh = q.reshape(B, S, nhead, Dh)
    kh = k.reshape(B, S, nhead, Dh)
    vh = v.reshape(B, S, nhead, Dh)
    s = jnp.einsum("bqhd,bkhd->bhqk", qh, kh) * scale
    pw = jax.nn.softmax(s, axis=-1)
    attn = pw.mean(axis=1)
    ctx = jnp.einsum("bhqk,bkhd->bqhd", pw, vh).reshape(B, S, D)
    src = x + (ctx @ p["wo"] + p["bo"])
    mu = src.mean(-1, keepdims=True)
    var = ((src - mu) ** 2).mean(-1, keepdims=True)
    src = (src - mu) / jnp.sqrt(var + eps) * p["ln1w"] + p["ln1b"]
    h = jax.nn.relu(src @ p["w1"] + p["b1"])
    src = src + (h @ p["w2"] + p["b2"])
    mu = src.mean(-1, keepdims=True)
    var = ((src - mu) ** 2).mean(-1, keepdims=True)
    src = (src - mu) / jnp.sqrt(var + eps) * p["ln2w"] + p["ln2b"]
    return src, attn


def ref_encoder(src, params, nhead):
    x = jnp.transpose(src, (1, 0, 2))
    attns = []
    for p in params:
        x, a = ref_layer(x, p, nhead)
        attns.append(a)
    return jnp.transpose(x, (1, 0, 2)), attns


# ----------------------------------------------------------------------------
# Deterministic parameter init (synthetic; shapes follow the PyTorch module).
# ----------------------------------------------------------------------------
def init_layer_params(key, d_model):
    D = d_model
    Dff = 4 * D
    ks = jax.random.split(key, 12)
    n = lambda k, shape, s: (jax.random.normal(k, shape, jnp.float32) * s)
    return {
        "wq": n(ks[0], (D, D), 1.0 / np.sqrt(D)),
        "wk": n(ks[1], (D, D), 1.0 / np.sqrt(D)),
        "wv": n(ks[2], (D, D), 1.0 / np.sqrt(D)),
        "bq": n(ks[3], (1, D), 0.02),
        "bk": n(ks[4], (1, D), 0.02),
        "bv": n(ks[5], (1, D), 0.02),
        "wo": n(ks[6], (D, D), 1.0 / np.sqrt(D)),
        "bo": n(ks[7], (1, D), 0.02),
        "w1": n(ks[8], (D, Dff), 1.0 / np.sqrt(D)),
        "b1": n(ks[9], (1, Dff), 0.02),
        "w2": n(ks[10], (Dff, D), 1.0 / np.sqrt(Dff)),
        "b2": n(ks[11], (1, D), 0.02),
        "ln1w": jnp.ones((1, D), jnp.float32),
        "ln1b": jnp.zeros((1, D), jnp.float32),
        "ln2w": jnp.ones((1, D), jnp.float32),
        "ln2b": jnp.zeros((1, D), jnp.float32),
    }


if __name__ == "__main__":
    num_layers, d_model, nhead = 2, 32, 4
    seq_len, batch = 8, 2

    key = jax.random.PRNGKey(0)
    k_src, *k_layers = jax.random.split(key, num_layers + 1)
    src = jax.random.normal(k_src, (seq_len, batch, d_model), jnp.float32)
    params = [init_layer_params(k_layers[i], d_model) for i in range(num_layers)]

    ref_out, ref_attns = ref_encoder(src, params, nhead)

    # --- f32-matmul path: tight parity vs the pure-JAX reference ------------
    run_f32 = jax.jit(functools.partial(
        multi_transformer_encoder, nhead=nhead, need_weights=True,
        matmul_dtype=jnp.float32))
    out, attn_all = run_f32(src, params)
    out = jax.block_until_ready(out)
    attn_all = [jax.block_until_ready(a) for a in attn_all]

    np.testing.assert_allclose(np.asarray(out), np.asarray(ref_out),
                               atol=2e-3, rtol=2e-3)
    for a, ra in zip(attn_all, ref_attns):
        np.testing.assert_allclose(np.asarray(a), np.asarray(ra),
                                   atol=2e-3, rtol=2e-3)

    # --- default bf16-weight path + batch-block-parallel grid (v7x 2-TC) ----
    run_bf16 = jax.jit(functools.partial(
        multi_transformer_encoder, nhead=nhead, need_weights=True,
        matmul_dtype=jnp.bfloat16, batch_block=1))
    out_bf, _ = run_bf16(src, params)
    out_bf = jax.block_until_ready(out_bf)
    np.testing.assert_allclose(np.asarray(out_bf), np.asarray(ref_out),
                               atol=1e-1, rtol=1e-1)   # bf16 weights: loose check

    assert out.shape == (seq_len, batch, d_model)
    assert all(a.shape == (batch, seq_len, seq_len) for a in attn_all)
    print("KERNEL_OK")
</pallas_src>

<mosaic_0001>
module attributes {stable_mosaic.version = 11 : i64} {
  func.func @fused_encoder_kernel(%arg0: i32, %arg1: i32, %arg2: memref<2x8x32xf32, #tpu.memory_space<vmem>>, %arg3: memref<1x32x32xf32, #tpu.memory_space<vmem>>, %arg4: memref<1x32x32xf32, #tpu.memory_space<vmem>>, %arg5: memref<1x32x32xf32, #tpu.memory_space<vmem>>, %arg6: memref<1x32x32xf32, #tpu.memory_space<vmem>>, %arg7: memref<1x32x128xf32, #tpu.memory_space<vmem>>, %arg8: memref<1x128x32xf32, #tpu.memory_space<vmem>>, %arg9: memref<1x1x128xf32, #tpu.memory_space<vmem>>, %arg10: memref<1x9x32xf32, #tpu.memory_space<vmem>>, %arg11: memref<2x8x32xf32, #tpu.memory_space<vmem>>, %arg12: memref<1x2x8x8xf32, #tpu.memory_space<vmem>>) attributes {dimension_semantics = [#tpu.dimension_semantics<parallel>, #tpu.dimension_semantics<arbitrary>], iteration_bounds = array<i64: 1, 2>, scalar_prefetch = 0 : i64, scratch_operands = 0 : i64, tpu.core_type = #tpu.core_type<tc>, window_params = [{transform_indices = @transform_0, window_bounds = array<i64: 2, 8, 32>}, {transform_indices = @transform_1, window_bounds = array<i64: 1, 32, 32>}, {transform_indices = @transform_2, window_bounds = array<i64: 1, 32, 32>}, {transform_indices = @transform_3, window_bounds = array<i64: 1, 32, 32>}, {transform_indices = @transform_4, window_bounds = array<i64: 1, 32, 32>}, {transform_indices = @transform_5, window_bounds = array<i64: 1, 32, 128>}, {transform_indices = @transform_6, window_bounds = array<i64: 1, 128, 32>}, {transform_indices = @transform_7, window_bounds = array<i64: 1, 1, 128>}, {transform_indices = @transform_8, window_bounds = array<i64: 1, 9, 32>}, {transform_indices = @transform_9, window_bounds = array<i64: 2, 8, 32>}, {transform_indices = @transform_10, window_bounds = array<i64: 1, 2, 8, 8>}]} {
    %c0_i32 = arith.constant 0 : i32
    %0 = arith.cmpi eq, %arg1, %c0_i32 : i32
    %1 = arith.extui %0 : i1 to i32
    %c0_i32_0 = arith.constant 0 : i32
    %2 = arith.cmpi ne, %1, %c0_i32_0 : i32
    scf.if %2 {
      %c0_58 = arith.constant 0 : index
      %c0_59 = arith.constant 0 : index
      %c0_60 = arith.constant 0 : index
      %159 = vector.load %arg2[%c0_58, %c0_59, %c0_60] : memref<2x8x32xf32, #tpu.memory_space<vmem>>, vector<2x8x32xf32>
      %c0_61 = arith.constant 0 : index
      %c0_62 = arith.constant 0 : index
      %c0_63 = arith.constant 0 : index
      %160 = vector.load %arg11[%c0_61, %c0_62, %c0_63] : memref<2x8x32xf32, #tpu.memory_space<vmem>>, vector<2x8x32xf32>
      tpu.vector_store %arg11[%c0_61, %c0_62, %c0_63], %159 {strides = array<i32>} : memref<2x8x32xf32, #tpu.memory_space<vmem>>, vector<2x8x32xf32>,
    } else {
    }
    %c0 = arith.constant 0 : index
    %c0_1 = arith.constant 0 : index
    %c0_2 = arith.constant 0 : index
    %3 = vector.load %arg11[%c0, %c0_1, %c0_2] : memref<2x8x32xf32, #tpu.memory_space<vmem>>, vector<2x8x32xf32>
    %4 = vector.shape_cast %3 : vector<2x8x32xf32> to vector<16x32xf32>
    %c0_3 = arith.constant 0 : index
    %c0_4 = arith.constant 0 : index
    %c0_5 = arith.constant 0 : index
    %5 = vector.load %arg10[%c0_3, %c0_4, %c0_5] : memref<1x9x32xf32, #tpu.memory_space<vmem>>, vector<1x9x32xf32>
    %6 = vector.shape_cast %5 : vector<1x9x32xf32> to vector<9x32xf32>
    %7 = vector.extract_strided_slice %6 {offsets = [0, 0], sizes = [1, 32], strides = [1, 1]} : vector<9x32xf32> to vector<1x32xf32>
    %8 = vector.extract_strided_slice %6 {offsets = [1, 0], sizes = [1, 32], strides = [1, 1]} : vector<9x32xf32> to vector<1x32xf32>
    %9 = vector.extract_strided_slice %6 {offsets = [2, 0], sizes = [1, 32], strides = [1, 1]} : vector<9x32xf32> to vector<1x32xf32>
    %10 = vector.extract_strided_slice %6 {offsets = [3, 0], sizes = [1, 32], strides = [1, 1]} : vector<9x32xf32> to vector<1x32xf32>
    %11 = vector.extract_strided_slice %6 {offsets = [4, 0], sizes = [1, 32], strides = [1, 1]} : vector<9x32xf32> to vector<1x32xf32>
    %12 = vector.extract_strided_slice %6 {offsets = [5, 0], sizes = [1, 32], strides = [1, 1]} : vector<9x32xf32> to vector<1x32xf32>
    %13 = vector.extract_strided_slice %6 {offsets = [6, 0], sizes = [1, 32], strides = [1, 1]} : vector<9x32xf32> to vector<1x32xf32>
    %14 = vector.extract_strided_slice %6 {offsets = [7, 0], sizes = [1, 32], strides = [1, 1]} : vector<9x32xf32> to vector<1x32xf32>
    %15 = vector.extract_strided_slice %6 {offsets = [8, 0], sizes = [1, 32], strides = [1, 1]} : vector<9x32xf32> to vector<1x32xf32>
    %c0_6 = arith.constant 0 : index
    %c0_7 = arith.constant 0 : index
    %c0_8 = arith.constant 0 : index
    %16 = vector.load %arg3[%c0_6, %c0_7, %c0_8] : memref<1x32x32xf32, #tpu.memory_space<vmem>>, vector<1x32x32xf32>
    %17 = vector.shape_cast %16 : vector<1x32x32xf32> to vector<32x32xf32>
    %cst = arith.constant dense<0.000000e+00> : vector<16x32xf32>
    %18 = tpu.matmul %4, %17, %cst {dimension_numbers = #tpu.dot_dimension_numbers<[1], [0], [0], [1], [0, 0, 1, 1], [], []>} : vector<16x32xf32>, vector<32x32xf32>, vector<16x32xf32> -> vector<16x32xf32>
    %19 = vector.broadcast %7 : vector<1x32xf32> to vector<16x32xf32>
    %20 = arith.addf %18, %19 : vector<16x32xf32>
    %cst_9 = arith.constant 0.353553385 : f32
    %21 = vector.broadcast %cst_9 : f32 to vector<16x32xf32>
    %22 = arith.mulf %20, %21 : vector<16x32xf32>
    %c0_10 = arith.constant 0 : index
    %c0_11 = arith.constant 0 : index
    %c0_12 = arith.constant 0 : index
    %23 = vector.load %arg4[%c0_10, %c0_11, %c0_12] : memref<1x32x32xf32, #tpu.memory_space<vmem>>, vector<1x32x32xf32>
    %24 = vector.shape_cast %23 : vector<1x32x32xf32> to vector<32x32xf32>
    %cst_13 = arith.constant dense<0.000000e+00> : vector<16x32xf32>
    %25 = tpu.matmul %4, %24, %cst_13 {dimension_numbers = #tpu.dot_dimension_numbers<[1], [0], [0], [1], [0, 0, 1, 1], [], []>} : vector<16x32xf32>, vector<32x32xf32>, vector<16x32xf32> -> vector<16x32xf32>
    %26 = vector.broadcast %8 : vector<1x32xf32> to vector<16x32xf32>
    %27 = arith.addf %25, %26 : vector<16x32xf32>
    %c0_14 = arith.constant 0 : index
    %c0_15 = arith.constant 0 : index
    %c0_16 = arith.constant 0 : index
    %28 = vector.load %arg5[%c0_14, %c0_15, %c0_16] : memref<1x32x32xf32, #tpu.memory_space<vmem>>, vector<1x32x32xf32>
    %29 = vector.shape_cast %28 : vector<1x32x32xf32> to vector<32x32xf32>
    %cst_17 = arith.constant dense<0.000000e+00> : vector<16x32xf32>
    %30 = tpu.matmul %4, %29, %cst_17 {dimension_numbers = #tpu.dot_dimension_numbers<[1], [0], [0], [1], [0, 0, 1, 1], [], []>} : vector<16x32xf32>, vector<32x32xf32>, vector<16x32xf32> -> vector<16x32xf32>
    %31 = vector.broadcast %9 : vector<1x32xf32> to vector<16x32xf32>
    %32 = arith.addf %30, %31 : vector<16x32xf32>
    %33 = vector.extract_strided_slice %22 {offsets = [0, 0], sizes = [16, 8], strides = [1, 1]} : vector<16x32xf32> to vector<16x8xf32>
    %34 = vector.shape_cast %33 : vector<16x8xf32> to vector<2x8x8xf32>
    %35 = vector.extract_strided_slice %22 {offsets = [0, 8], sizes = [16, 8], strides = [1, 1]} : vector<16x32xf32> to vector<16x8xf32>
    %36 = vector.shape_cast %35 : vector<16x8xf32> to vector<2x8x8xf32>
    %37 = vector.extract_strided_slice %22 {offsets = [0, 16], sizes = [16, 8], strides = [1, 1]} : vector<16x32xf32> to vector<16x8xf32>
    %38 = vector.shape_cast %37 : vector<16x8xf32> to vector<2x8x8xf32>
    %39 = vector.extract_strided_slice %22 {offsets = [0, 24], sizes = [16, 8], strides = [1, 1]} : vector<16x32xf32> to vector<16x8xf32>
    %40 = vector.shape_cast %39 : vector<16x8xf32> to vector<2x8x8xf32>
    %41 = tpu.concatenate %34, %36, %38, %40 in 0 : vector<2x8x8xf32>, vector<2x8x8xf32>, vector<2x8x8xf32>, vector<2x8x8xf32> -> vector<8x8x8xf32>
    %42 = vector.extract_strided_slice %27 {offsets = [0, 0], sizes = [16, 8], strides = [1, 1]} : vector<16x32xf32> to vector<16x8xf32>
    %43 = vector.shape_cast %42 : vector<16x8xf32> to vector<2x8x8xf32>
    %44 = vector.extract_strided_slice %27 {offsets = [0, 8], sizes = [16, 8], strides = [1, 1]} : vector<16x32xf32> to vector<16x8xf32>
    %45 = vector.shape_cast %44 : vector<16x8xf32> to vector<2x8x8xf32>
    %46 = vector.extract_strided_slice %27 {offsets = [0, 16], sizes = [16, 8], strides = [1, 1]} : vector<16x32xf32> to vector<16x8xf32>
    %47 = vector.shape_cast %46 : vector<16x8xf32> to vector<2x8x8xf32>
    %48 = vector.extract_strided_slice %27 {offsets = [0, 24], sizes = [16, 8], strides = [1, 1]} : vector<16x32xf32> to vector<16x8xf32>
    %49 = vector.shape_cast %48 : vector<16x8xf32> to vector<2x8x8xf32>
    %50 = tpu.concatenate %43, %45, %47, %49 in 0 : vector<2x8x8xf32>, vector<2x8x8xf32>, vector<2x8x8xf32>, vector<2x8x8xf32> -> vector<8x8x8xf32>
    %51 = vector.extract_strided_slice %32 {offsets = [0, 0], sizes = [16, 8], strides = [1, 1]} : vector<16x32xf32> to vector<16x8xf32>
    %52 = vector.shape_cast %51 : vector<16x8xf32> to vector<2x8x8xf32>
    %53 = vector.extract_strided_slice %32 {offsets = [0, 8], sizes = [16, 8], strides = [1, 1]} : vector<16x32xf32> to vector<16x8xf32>
    %54 = vector.shape_cast %53 : vector<16x8xf32> to vector<2x8x8xf32>
    %55 = vector.extract_strided_slice %32 {offsets = [0, 16], sizes = [16, 8], strides = [1, 1]} : vector<16x32xf32> to vector<16x8xf32>
    %56 = vector.shape_cast %55 : vector<16x8xf32> to vector<2x8x8xf32>
    %57 = vector.extract_strided_slice %32 {offsets = [0, 24], sizes = [16, 8], strides = [1, 1]} : vector<16x32xf32> to vector<16x8xf32>
    %58 = vector.shape_cast %57 : vector<16x8xf32> to vector<2x8x8xf32>
    %59 = tpu.concatenate %52, %54, %56, %58 in 0 : vector<2x8x8xf32>, vector<2x8x8xf32>, vector<2x8x8xf32>, vector<2x8x8xf32> -> vector<8x8x8xf32>
    "tpu.trace_start"() <{level = 10 : i32, message = "bqd,bkd->bqk"}> : () -> ()
    %cst_18 = arith.constant dense<0.000000e+00> : vector<8x8x8xf32>
    %60 = tpu.matmul %41, %50, %cst_18 {dimension_numbers = #tpu.dot_dimension_numbers<[2], [2], [1], [1], [0, 0, 0, 1, 1, 1], [0], [0]>} : vector<8x8x8xf32>, vector<8x8x8xf32>, vector<8x8x8xf32> -> vector<8x8x8xf32>
    "tpu.trace_stop"() : () -> ()
    %cst_19 = arith.constant dense<0xFF800000> : vector<8x8xf32>
    %61 = vector.multi_reduction <maximumf>, %60, %cst_19 [2] : vector<8x8x8xf32> to vector<8x8xf32>
    %62 = vector.shape_cast %61 : vector<8x8xf32> to vector<8x8x1xf32>
    %63 = vector.broadcast %62 : vector<8x8x1xf32> to vector<8x8x8xf32>
    %64 = arith.subf %60, %63 : vector<8x8x8xf32>
    %65 = math.exp %64 : vector<8x8x8xf32>
    %cst_20 = arith.constant dense<0.000000e+00> : vector<8x8xf32>
    %66 = vector.multi_reduction <add>, %65, %cst_20 [2] : vector<8x8x8xf32> to vector<8x8xf32>
    %67 = vector.shape_cast %66 : vector<8x8xf32> to vector<8x8x1xf32>
    %68 = tpu.reciprocal %67 {approx = true} : vector<8x8x1xf32> -> vector<8x8x1xf32>
    %69 = arith.mulf %67, %68 : vector<8x8x1xf32>
    %cst_21 = arith.constant 2.000000e+00 : f32
    %70 = vector.broadcast %cst_21 : f32 to vector<8x8x1xf32>
    %71 = arith.subf %70, %69 : vector<8x8x1xf32>
    %72 = arith.mulf %68, %71 : vector<8x8x1xf32>
    %73 = vector.broadcast %72 : vector<8x8x1xf32> to vector<8x8x8xf32>
    %74 = arith.mulf %65, %73 : vector<8x8x8xf32>
    %75 = vector.shape_cast %74 : vector<8x8x8xf32> to vector<4x2x8x8xf32>
    %cst_22 = arith.constant dense<0.000000e+00> : vector<2x8x8xf32>
    %76 = vector.multi_reduction <add>, %75, %cst_22 [0] : vector<4x2x8x8xf32> to vector<2x8x8xf32>
    %cst_23 = arith.constant 4.000000e+00 : f32
    %77 = vector.broadcast %cst_23 : f32 to vector<2x8x8xf32>
    %78 = arith.divf %76, %77 : vector<2x8x8xf32>
    %c0_24 = arith.constant 0 : index
    %c0_25 = arith.constant 0 : index
    %c0_26 = arith.constant 0 : index
    %c0_27 = arith.constant 0 : index
    %79 = vector.load %arg12[%c0_24, %c0_25, %c0_26, %c0_27] : memref<1x2x8x8xf32, #tpu.memory_space<vmem>>, vector<1x2x8x8xf32>
    %80 = vector.shape_cast %79 : vector<1x2x8x8xf32> to vector<2x8x8xf32>
    %81 = vector.shape_cast %78 : vector<2x8x8xf32> to vector<1x2x8x8xf32>
    tpu.vector_store %arg12[%c0_24, %c0_25, %c0_26, %c0_27], %81 {strides = array<i32>} : memref<1x2x8x8xf32, #tpu.memory_space<vmem>>, vector<1x2x8x8xf32>,
    "tpu.trace_start"() <{level = 10 : i32, message = "bqk,bkd->bqd"}> : () -> ()
    %cst_28 = arith.constant dense<0.000000e+00> : vector<8x8x8xf32>
    %82 = tpu.matmul %74, %59, %cst_28 {dimension_numbers = #tpu.dot_dimension_numbers<[2], [1], [1], [2], [0, 0, 0, 1, 1, 2], [0], [0]>} : vector<8x8x8xf32>, vector<8x8x8xf32>, vector<8x8x8xf32> -> vector<8x8x8xf32>
    "tpu.trace_stop"() : () -> ()
    %83 = vector.extract_strided_slice %82 {offsets = [0, 0, 0], sizes = [2, 8, 8], strides = [1, 1, 1]} : vector<8x8x8xf32> to vector<2x8x8xf32>
    %84 = vector.shape_cast %83 : vector<2x8x8xf32> to vector<16x8xf32>
    %85 = vector.extract_strided_slice %82 {offsets = [2, 0, 0], sizes = [2, 8, 8], strides = [1, 1, 1]} : vector<8x8x8xf32> to vector<2x8x8xf32>
    %86 = vector.shape_cast %85 : vector<2x8x8xf32> to vector<16x8xf32>
    %87 = vector.extract_strided_slice %82 {offsets = [4, 0, 0], sizes = [2, 8, 8], strides = [1, 1, 1]} : vector<8x8x8xf32> to vector<2x8x8xf32>
    %88 = vector.shape_cast %87 : vector<2x8x8xf32> to vector<16x8xf32>
    %89 = vector.extract_strided_slice %82 {offsets = [6, 0, 0], sizes = [2, 8, 8], strides = [1, 1, 1]} : vector<8x8x8xf32> to vector<2x8x8xf32>
    %90 = vector.shape_cast %89 : vector<2x8x8xf32> to vector<16x8xf32>
    %91 = tpu.concatenate %84, %86, %88, %90 in 1 : vector<16x8xf32>, vector<16x8xf32>, vector<16x8xf32>, vector<16x8xf32> -> vector<16x32xf32>
    %c0_29 = arith.constant 0 : index
    %c0_30 = arith.constant 0 : index
    %c0_31 = arith.constant 0 : index
    %92 = vector.load %arg6[%c0_29, %c0_30, %c0_31] : memref<1x32x32xf32, #tpu.memory_space<vmem>>, vector<1x32x32xf32>
    %93 = vector.shape_cast %92 : vector<1x32x32xf32> to vector<32x32xf32>
    %cst_32 = arith.constant dense<0.000000e+00> : vector<16x32xf32>
    %94 = tpu.matmul %91, %93, %cst_32 {dimension_numbers = #tpu.dot_dimension_numbers<[1], [0], [0], [1], [0, 0, 1, 1], [], []>} : vector<16x32xf32>, vector<32x32xf32>, vector<16x32xf32> -> vector<16x32xf32>
    %95 = arith.addf %4, %94 : vector<16x32xf32>
    %96 = vector.broadcast %10 : vector<1x32xf32> to vector<16x32xf32>
    %97 = arith.addf %95, %96 : vector<16x32xf32>
    %cst_33 = arith.constant dense<0.000000e+00> : vector<16xf32>
    %98 = vector.multi_reduction <add>, %97, %cst_33 [1] : vector<16x32xf32> to vector<16xf32>
    %99 = vector.shape_cast %98 : vector<16xf32> to vector<16x1xf32>
    %cst_34 = arith.constant 3.200000e+01 : f32
    %100 = vector.broadcast %cst_34 : f32 to vector<16x1xf32>
    %101 = arith.divf %99, %100 : vector<16x1xf32>
    %102 = vector.broadcast %101 : vector<16x1xf32> to vector<16x32xf32>
    %103 = arith.subf %97, %102 : vector<16x32xf32>
    %104 = arith.mulf %103, %103 : vector<16x32xf32>
    %cst_35 = arith.constant dense<0.000000e+00> : vector<16xf32>
    %105 = vector.multi_reduction <add>, %104, %cst_35 [1] : vector<16x32xf32> to vector<16xf32>
    %106 = vector.shape_cast %105 : vector<16xf32> to vector<16x1xf32>
    %cst_36 = arith.constant 3.200000e+01 : f32
    %107 = vector.broadcast %cst_36 : f32 to vector<16x1xf32>
    %108 = arith.divf %106, %107 : vector<16x1xf32>
    %109 = vector.broadcast %101 : vector<16x1xf32> to vector<16x32xf32>
    %110 = arith.subf %97, %109 : vector<16x32xf32>
    %cst_37 = arith.constant 9.99999974E-6 : f32
    %111 = vector.broadcast %cst_37 : f32 to vector<16x1xf32>
    %112 = arith.addf %108, %111 : vector<16x1xf32>
    %113 = math.rsqrt %112 : vector<16x1xf32>
    %114 = vector.broadcast %113 : vector<16x1xf32> to vector<16x32xf32>
    %115 = arith.mulf %110, %114 : vector<16x32xf32>
    %116 = vector.broadcast %12 : vector<1x32xf32> to vector<16x32xf32>
    %117 = arith.mulf %115, %116 : vector<16x32xf32>
    %118 = vector.broadcast %13 : vector<1x32xf32> to vector<16x32xf32>
    %119 = arith.addf %117, %118 : vector<16x32xf32>
    %c0_38 = arith.constant 0 : index
    %c0_39 = arith.constant 0 : index
    %c0_40 = arith.constant 0 : index
    %120 = vector.load %arg7[%c0_38, %c0_39, %c0_40] : memref<1x32x128xf32, #tpu.memory_space<vmem>>, vector<1x32x128xf32>
    %121 = vector.shape_cast %120 : vector<1x32x128xf32> to vector<32x128xf32>
    %cst_41 = arith.constant dense<0.000000e+00> : vector<16x128xf32>
    %122 = tpu.matmul %119, %121, %cst_41 {dimension_numbers = #tpu.dot_dimension_numbers<[1], [0], [0], [1], [0, 0, 1, 1], [], []>} : vector<16x32xf32>, vector<32x128xf32>, vector<16x128xf32> -> vector<16x128xf32>
    %c0_42 = arith.constant 0 : index
    %c0_43 = arith.constant 0 : index
    %c0_44 = arith.constant 0 : index
    %123 = vector.load %arg9[%c0_42, %c0_43, %c0_44] : memref<1x1x128xf32, #tpu.memory_space<vmem>>, vector<1x1x128xf32>
    %124 = vector.shape_cast %123 : vector<1x1x128xf32> to vector<1x128xf32>
    %125 = vector.broadcast %124 : vector<1x128xf32> to vector<16x128xf32>
    %126 = arith.addf %122, %125 : vector<16x128xf32>
    %cst_45 = arith.constant 0.000000e+00 : f32
    %127 = vector.broadcast %cst_45 : f32 to vector<16x128xf32>
    %128 = arith.maximumf %126, %127 : vector<16x128xf32>
    %c0_46 = arith.constant 0 : index
    %c0_47 = arith.constant 0 : index
    %c0_48 = arith.constant 0 : index
    %129 = vector.load %arg8[%c0_46, %c0_47, %c0_48] : memref<1x128x32xf32, #tpu.memory_space<vmem>>, vector<1x128x32xf32>
    %130 = vector.shape_cast %129 : vector<1x128x32xf32> to vector<128x32xf32>
    %cst_49 = arith.constant dense<0.000000e+00> : vector<16x32xf32>
    %131 = tpu.matmul %128, %130, %cst_49 {dimension_numbers = #tpu.dot_dimension_numbers<[1], [0], [0], [1], [0, 0, 1, 1], [], []>} : vector<16x128xf32>, vector<128x32xf32>, vector<16x32xf32> -> vector<16x32xf32>
    %132 = arith.addf %119, %131 : vector<16x32xf32>
    %133 = vector.broadcast %11 : vector<1x32xf32> to vector<16x32xf32>
    %134 = arith.addf %132, %133 : vector<16x32xf32>
    %cst_50 = arith.constant dense<0.000000e+00> : vector<16xf32>
    %135 = vector.multi_reduction <add>, %134, %cst_50 [1] : vector<16x32xf32> to vector<16xf32>
    %136 = vector.shape_cast %135 : vector<16xf32> to vector<16x1xf32>
    %cst_51 = arith.constant 3.200000e+01 : f32
    %137 = vector.broadcast %cst_51 : f32 to vector<16x1xf32>
    %138 = arith.divf %136, %137 : vector<16x1xf32>
    %139 = vector.broadcast %138 : vector<16x1xf32> to vector<16x32xf32>
    %140 = arith.subf %134, %139 : vector<16x32xf32>
    %141 = arith.mulf %140, %140 : vector<16x32xf32>
    %cst_52 = arith.constant dense<0.000000e+00> : vector<16xf32>
    %142 = vector.multi_reduction <add>, %141, %cst_52 [1] : vector<16x32xf32> to vector<16xf32>
    %143 = vector.shape_cast %142 : vector<16xf32> to vector<16x1xf32>
    %cst_53 = arith.constant 3.200000e+01 : f32
    %144 = vector.broadcast %cst_53 : f32 to vector<16x1xf32>
    %145 = arith.divf %143, %144 : vector<16x1xf32>
    %146 = vector.broadcast %138 : vector<16x1xf32> to vector<16x32xf32>
    %147 = arith.subf %134, %146 : vector<16x32xf32>
    %cst_54 = arith.constant 9.99999974E-6 : f32
    %148 = vector.broadcast %cst_54 : f32 to vector<16x1xf32>
    %149 = arith.addf %145, %148 : vector<16x1xf32>
    %150 = math.rsqrt %149 : vector<16x1xf32>
    %151 = vector.broadcast %150 : vector<16x1xf32> to vector<16x32xf32>
    %152 = arith.mulf %147, %151 : vector<16x32xf32>
    %153 = vector.broadcast %14 : vector<1x32xf32> to vector<16x32xf32>
    %154 = arith.mulf %152, %153 : vector<16x32xf32>
    %155 = vector.broadcast %15 : vector<1x32xf32> to vector<16x32xf32>
    %156 = arith.addf %154, %155 : vector<16x32xf32>
    %157 = vector.shape_cast %156 : vector<16x32xf32> to vector<2x8x32xf32>
    %c0_55 = arith.constant 0 : index
    %c0_56 = arith.constant 0 : index
    %c0_57 = arith.constant 0 : index
    %158 = vector.load %arg11[%c0_55, %c0_56, %c0_57] : memref<2x8x32xf32, #tpu.memory_space<vmem>>, vector<2x8x32xf32>
    tpu.vector_store %arg11[%c0_55, %c0_56, %c0_57], %157 {strides = array<i32>} : memref<2x8x32xf32, #tpu.memory_space<vmem>>, vector<2x8x32xf32>,
    return
  }
  func.func @transform_0(%arg0: i32, %arg1: i32) -> (i32, i32, i32) {
    %c0_i32 = arith.constant 0 : i32
    %c0_i32_0 = arith.constant 0 : i32
    %c0_i32_1 = arith.constant 0 : i32
    return %arg0, %c0_i32, %c0_i32_0 : i32, i32, i32
  }
  func.func @transform_1(%arg0: i32, %arg1: i32) -> (i32, i32, i32) {
    %c0_i32 = arith.constant 0 : i32
    %c0_i32_0 = arith.constant 0 : i32
    %c0_i32_1 = arith.constant 0 : i32
    return %arg1, %c0_i32, %c0_i32_0 : i32, i32, i32
  }
  func.func @transform_2(%arg0: i32, %arg1: i32) -> (i32, i32, i32) {
    %c0_i32 = arith.constant 0 : i32
    %c0_i32_0 = arith.constant 0 : i32
    %c0_i32_1 = arith.constant 0 : i32
    return %arg1, %c0_i32, %c0_i32_0 : i32, i32, i32
  }
  func.func @transform_3(%arg0: i32, %arg1: i32) -> (i32, i32, i32) {
    %c0_i32 = arith.constant 0 : i32
    %c0_i32_0 = arith.constant 0 : i32
    %c0_i32_1 = arith.constant 0 : i32
    return %arg1, %c0_i32, %c0_i32_0 : i32, i32, i32
  }
  func.func @transform_4(%arg0: i32, %arg1: i32) -> (i32, i32, i32) {
    %c0_i32 = arith.constant 0 : i32
    %c0_i32_0 = arith.constant 0 : i32
    %c0_i32_1 = arith.constant 0 : i32
    return %arg1, %c0_i32, %c0_i32_0 : i32, i32, i32
  }
  func.func @transform_5(%arg0: i32, %arg1: i32) -> (i32, i32, i32) {
    %c0_i32 = arith.constant 0 : i32
    %c0_i32_0 = arith.constant 0 : i32
    %c0_i32_1 = arith.constant 0 : i32
    return %arg1, %c0_i32, %c0_i32_0 : i32, i32, i32
  }
  func.func @transform_6(%arg0: i32, %arg1: i32) -> (i32, i32, i32) {
    %c0_i32 = arith.constant 0 : i32
    %c0_i32_0 = arith.constant 0 : i32
    %c0_i32_1 = arith.constant 0 : i32
    return %arg1, %c0_i32, %c0_i32_0 : i32, i32, i32
  }
  func.func @transform_7(%arg0: i32, %arg1: i32) -> (i32, i32, i32) {
    %c0_i32 = arith.constant 0 : i32
    %c0_i32_0 = arith.constant 0 : i32
    %c0_i32_1 = arith.constant 0 : i32
    return %arg1, %c0_i32, %c0_i32_0 : i32, i32, i32
  }
  func.func @transform_8(%arg0: i32, %arg1: i32) -> (i32, i32, i32) {
    %c0_i32 = arith.constant 0 : i32
    %c0_i32_0 = arith.constant 0 : i32
    %c0_i32_1 = arith.constant 0 : i32
    return %arg1, %c0_i32, %c0_i32_0 : i32, i32, i32
  }
  func.func @transform_9(%arg0: i32, %arg1: i32) -> (i32, i32, i32) {
    %c0_i32 = arith.constant 0 : i32
    %c0_i32_0 = arith.constant 0 : i32
    %c0_i32_1 = arith.constant 0 : i32
    return %arg0, %c0_i32, %c0_i32_0 : i32, i32, i32
  }
  func.func @transform_10(%arg0: i32, %arg1: i32) -> (i32, i32, i32, i32) {
    %c0_i32 = arith.constant 0 : i32
    %c0_i32_0 = arith.constant 0 : i32
    %c0_i32_1 = arith.constant 0 : i32
    return %arg1, %arg0, %c0_i32, %c0_i32_0 : i32, i32, i32, i32
  }
}

</mosaic_0001>

<llo_original>
// kernel: multi_transformer_encoder.1
$region0: #{multi_transformer_encoder.1}
  #allocation0 [shape = 'u32[]', space=smem, size = 0x4, offset = 0x4, fixed_abs, tag = 'smem constant byte address 0x4 - core index']
  #allocation1 [shape = 'u32[72,128]{1,0:T(1,128)}', space=vmem, size = 0x9000, scoped, tag = 'internal scratch']
  %s0 = inlined_call_operand.vmem [shape: f32[2,8,32], index: 0, kind: input, shape index: {}, may-alias: {0,9}]
  %s1 = inlined_call_operand.vmem [shape: f32[2,32,32], index: 1, kind: input, shape index: {}]
  %s2 = inlined_call_operand.vmem [shape: f32[2,32,32], index: 2, kind: input, shape index: {}]
  %s3 = inlined_call_operand.vmem [shape: f32[2,32,32], index: 3, kind: input, shape index: {}]
  %s4 = inlined_call_operand.vmem [shape: f32[2,32,32], index: 4, kind: input, shape index: {}]
  %s5 = inlined_call_operand.vmem [shape: f32[2,32,128], index: 5, kind: input, shape index: {}]
  %s6 = inlined_call_operand.vmem [shape: f32[2,128,32], index: 6, kind: input, shape index: {}]
  %s7 = inlined_call_operand.vmem [shape: f32[2,1,128], index: 7, kind: input, shape index: {}]
  %s8 = inlined_call_operand.vmem [shape: f32[2,9,32], index: 8, kind: input, shape index: {}]
  %s9 = inlined_call_operand.vmem [shape: f32[2,8,32], index: 9, kind: output, shape index: {0}, may-alias: {0,9}]
  %s10 = inlined_call_operand.vmem [shape: f32[2,2,8,8], index: 10, kind: output, shape index: {1}]
  %11 = xla_tuple %s9, %s10
  %s12 = sld [smem:[#allocation0]]
  $region81: #{multi_transformer_encoder.1} parent=0
    _
  %s14 = ssub.s32 1, %s12
  %s15 = scalar_select 0, %s14, %s12
  loop: start=0, step=1, limit=4
  $region2: #{multi_transformer_encoder.1} parent=0 // loop_pre_header
    _
  $region3: #{multi_transformer_encoder.1} parent=0 // loop_header
    %s17 = sphi 0, %s21
    %p18 = scmp.ge.s32.totalorder %s17, 4
    %s24 = sphi 0, %s36
    %s25 = sphi 0, %s32
    %s26 = sphi 0, %s24
    %s27 = sphi 0, %s25
    %s28 = sphi 0, %s26
    %s29 = sphi 0, %s27
    %s39 = sphi 0, %s41
    %s42 = sphi 0, %s39
    %s43 = sphi 0, %s42
    %s59 = sphi 0, %s43
    %s65 = sphi 0, %s67
    %s68 = sphi 0, %s65
    %s69 = sphi 0, %s68
    %s85 = sphi 0, %s69
    %s91 = sphi 0, %s93
    %s94 = sphi 0, %s91
    %s95 = sphi 0, %s94
    %s111 = sphi 0, %s95
    %s117 = sphi 0, %s119
    %s120 = sphi 0, %s117
    %s121 = sphi 0, %s120
    %s137 = sphi 0, %s121
    %s143 = sphi 0, %s145
    %s146 = sphi 0, %s143
    %s147 = sphi 0, %s146
    %s163 = sphi 0, %s147
    %s169 = sphi 0, %s171
    %s172 = sphi 0, %s169
    %s173 = sphi 0, %s172
    %s189 = sphi 0, %s173
    %s195 = sphi 0, %s197
    %s198 = sphi 0, %s195
    %s199 = sphi 0, %s198
    %s215 = sphi 0, %s199
    %s221 = sphi 0, %s223
    %s224 = sphi 0, %s221
    %s225 = sphi 0, %s224
    %s241 = sphi 0, %s225
    %s247 = sphi 0, %s249
    %s250 = sphi 0, %s247
    %s251 = sphi 0, %s250
    %s267 = sphi 0, %s251
    %s273 = sphi 0, %s275
    %s276 = sphi 0, %s273
    %s277 = sphi 0, %s276
    %s293 = sphi 0, %s277
    %s301 = sphi 0, %s303
    %s304 = sphi 0, %s301
    %s305 = sphi 0, %s304
    %s321 = sphi 0, %s305
  $region4: #{multi_transformer_encoder.1} parent=0 // loop_header_branch
    %20 = sbr.rel (%p18) target = $region8
  $region5: #{multi_transformer_encoder.1} parent=0 // loop_body
    %s22 = ssub.s32 %s17, 1
    %s23 = ssub.s32 %s17, 2
    %s30 = sadd.s32 1, %s25
    %p31 = scmp.ge.s32.totalorder %s30, 2
    %s32 = scalar_select %p31, 0, %s30
    %s33 = sadd.s32 1, %s24
    %s34 = scalar_select %p31, %s33, %s24
    %p35 = scmp.ge.s32.totalorder %s34, 1
    %s36 = scalar_select %p35, 0, %s34
    %s37 = ssub.s32 %s24, %s36
    %p38 = scmp.eq.s32.totalorder %s37, 0
    %s40 = sadd.s32 %s39, 1
    %s41 = scalar_select %p38, %s39, %s40
    %p44 = pneg %p38
    %p45 = scmp.eq.s32.totalorder %s17, 1
    %p46 = por %p44, %p45
    %p47 = scmp.ne.s32.totalorder %s39, %s42
    %p48 = scmp.eq.s32.totalorder %s17, 0
    %p49 = por %p47, %p48
    %p50 = scmp.ne.s32.totalorder %s39, %s42
    %p51 = scmp.eq.s32.totalorder %s22, 1
    %p52 = por %p50, %p51
    %p53 = scmp.ne.s32.totalorder %s42, %s43
    %p54 = scmp.eq.s32.totalorder %s22, 0
    %p55 = por %p53, %p54
    %p56 = scmp.ne.s32.totalorder %s42, %s43
    %p57 = scmp.eq.s32.totalorder %s23, 1
    %p58 = por %p56, %p57
    %p60 = scmp.ne.s32.totalorder %s43, %s59
    %p61 = scmp.eq.s32.totalorder %s23, 0
    %p62 = por %p60, %p61
    %s63 = ssub.s32 %s25, %s32
    %p64 = scmp.eq.s32.totalorder %s63, 0
    %s66 = sadd.s32 %s65, 1
    %s67 = scalar_select %p64, %s65, %s66
    %p70 = pneg %p64
    %p71 = scmp.eq.s32.totalorder %s17, 1
    %p72 = por %p70, %p71
    %p73 = scmp.ne.s32.totalorder %s65, %s68
    %p74 = scmp.eq.s32.totalorder %s17, 0
    %p75 = por %p73, %p74
    %p76 = scmp.ne.s32.totalorder %s65, %s68
    %p77 = scmp.eq.s32.totalorder %s22, 1
    %p78 = por %p76, %p77
    %p79 = scmp.ne.s32.totalorder %s68, %s69
    %p80 = scmp.eq.s32.totalorder %s22, 0
    %p81 = por %p79, %p80
    %p82 = scmp.ne.s32.totalorder %s68, %s69
    %p83 = scmp.eq.s32.totalorder %s23, 1
    %p84 = por %p82, %p83
    %p86 = scmp.ne.s32.totalorder %s69, %s85
    %p87 = scmp.eq.s32.totalorder %s23, 0
    %p88 = por %p86, %p87
    %s89 = ssub.s32 %s25, %s32
    %p90 = scmp.eq.s32.totalorder %s89, 0
    %s92 = sadd.s32 %s91, 1
    %s93 = scalar_select %p90, %s91, %s92
    %p96 = pneg %p90
    %p97 = scmp.eq.s32.totalorder %s17, 1
    %p98 = por %p96, %p97
    %p99 = scmp.ne.s32.totalorder %s91, %s94
    %p100 = scmp.eq.s32.totalorder %s17, 0
    %p101 = por %p99, %p100
    %p102 = scmp.ne.s32.totalorder %s91, %s94
    %p103 = scmp.eq.s32.totalorder %s22, 1
    %p104 = por %p102, %p103
    %p105 = scmp.ne.s32.totalorder %s94, %s95
    %p106 = scmp.eq.s32.totalorder %s22, 0
    %p107 = por %p105, %p106
    %p108 = scmp.ne.s32.totalorder %s94, %s95
    %p109 = scmp.eq.s32.totalorder %s23, 1
    %p110 = por %p108, %p109
    %p112 = scmp.ne.s32.totalorder %s95, %s111
    %p113 = scmp.eq.s32.totalorder %s23, 0
    %p114 = por %p112, %p113
    %s115 = ssub.s32 %s25, %s32
    %p116 = scmp.eq.s32.totalorder %s115, 0
    %s118 = sadd.s32 %s117, 1
    %s119 = scalar_select %p116, %s117, %s118
    %p122 = pneg %p116
    %p123 = scmp.eq.s32.totalorder %s17, 1
    %p124 = por %p122, %p123
    %p125 = scmp.ne.s32.totalorder %s117, %s120
    %p126 = scmp.eq.s32.totalorder %s17, 0
    %p127 = por %p125, %p126
    %p128 = scmp.ne.s32.totalorder %s117, %s120
    %p129 = scmp.eq.s32.totalorder %s22, 1
    %p130 = por %p128, %p129
    %p131 = scmp.ne.s32.totalorder %s120, %s121
    %p132 = scmp.eq.s32.totalorder %s22, 0
    %p133 = por %p131, %p132
    %p134 = scmp.ne.s32.totalorder %s120, %s121
    %p135 = scmp.eq.s32.totalorder %s23, 1
    %p136 = por %p134, %p135
    %p138 = scmp.ne.s32.totalorder %s121, %s137
    %p139 = scmp.eq.s32.totalorder %s23, 0
    %p140 = por %p138, %p139
    %s141 = ssub.s32 %s25, %s32
    %p142 = scmp.eq.s32.totalorder %s141, 0
    %s144 = sadd.s32 %s143, 1
    %s145 = scalar_select %p142, %s143, %s144
    %p148 = pneg %p142
    %p149 = scmp.eq.s32.totalorder %s17, 1
    %p150 = por %p148, %p149
    %p151 = scmp.ne.s32.totalorder %s143, %s146
    %p152 = scmp.eq.s32.totalorder %s17, 0
    %p153 = por %p151, %p152
    %p154 = scmp.ne.s32.totalorder %s143, %s146
    %p155 = scmp.eq.s32.totalorder %s22, 1
    %p156 = por %p154, %p155
    %p157 = scmp.ne.s32.totalorder %s146, %s147
    %p158 = scmp.eq.s32.totalorder %s22, 0
    %p159 = por %p157, %p158
    %p160 = scmp.ne.s32.totalorder %s146, %s147
    %p161 = scmp.eq.s32.totalorder %s23, 1
    %p162 = por %p160, %p161
    %p164 = scmp.ne.s32.totalorder %s147, %s163
    %p165 = scmp.eq.s32.totalorder %s23, 0
    %p166 = por %p164, %p165
    %s167 = ssub.s32 %s25, %s32
    %p168 = scmp.eq.s32.totalorder %s167, 0
    %s170 = sadd.s32 %s169, 1
    %s171 = scalar_select %p168, %s169, %s170
    %p174 = pneg %p168
    %p175 = scmp.eq.s32.totalorder %s17, 1
    %p176 = por %p174, %p175
    %p177 = scmp.ne.s32.totalorder %s169, %s172
    %p178 = scmp.eq.s32.totalorder %s17, 0
    %p179 = por %p177, %p178
    %p180 = scmp.ne.s32.totalorder %s169, %s172
    %p181 = scmp.eq.s32.totalorder %s22, 1
    %p182 = por %p180, %p181
    %p183 = scmp.ne.s32.totalorder %s172, %s173
    %p184 = scmp.eq.s32.totalorder %s22, 0
    %p185 = por %p183, %p184
    %p186 = scmp.ne.s32.totalorder %s172, %s173
    %p187 = scmp.eq.s32.totalorder %s23, 1
    %p188 = por %p186, %p187
    %p190 = scmp.ne.s32.totalorder %s173, %s189
    %p191 = scmp.eq.s32.totalorder %s23, 0
    %p192 = por %p190, %p191
    %s193 = ssub.s32 %s25, %s32
    %p194 = scmp.eq.s32.totalorder %s193, 0
    %s196 = sadd.s32 %s195, 1
    %s197 = scalar_select %p194, %s195, %s196
    %p200 = pneg %p194
    %p201 = scmp.eq.s32.totalorder %s17, 1
    %p202 = por %p200, %p201
    %p203 = scmp.ne.s32.totalorder %s195, %s198
    %p204 = scmp.eq.s32.totalorder %s17, 0
    %p205 = por %p203, %p204
    %p206 = scmp.ne.s32.totalorder %s195, %s198
    %p207 = scmp.eq.s32.totalorder %s22, 1
    %p208 = por %p206, %p207
    %p209 = scmp.ne.s32.totalorder %s198, %s199
    %p210 = scmp.eq.s32.totalorder %s22, 0
    %p211 = por %p209, %p210
    %p212 = scmp.ne.s32.totalorder %s198, %s199
    %p213 = scmp.eq.s32.totalorder %s23, 1
    %p214 = por %p212, %p213
    %p216 = scmp.ne.s32.totalorder %s199, %s215
    %p217 = scmp.eq.s32.totalorder %s23, 0
    %p218 = por %p216, %p217
    %s219 = ssub.s32 %s25, %s32
    %p220 = scmp.eq.s32.totalorder %s219, 0
    %s222 = sadd.s32 %s221, 1
    %s223 = scalar_select %p220, %s221, %s222
    %p226 = pneg %p220
    %p227 = scmp.eq.s32.totalorder %s17, 1
    %p228 = por %p226, %p227
    %p229 = scmp.ne.s32.totalorder %s221, %s224
    %p230 = scmp.eq.s32.totalorder %s17, 0
    %p231 = por %p229, %p230
    %p232 = scmp.ne.s32.totalorder %s221, %s224
    %p233 = scmp.eq.s32.totalorder %s22, 1
    %p234 = por %p232, %p233
    %p235 = scmp.ne.s32.totalorder %s224, %s225
    %p236 = scmp.eq.s32.totalorder %s22, 0
    %p237 = por %p235, %p236
    %p238 = scmp.ne.s32.totalorder %s224, %s225
    %p239 = scmp.eq.s32.totalorder %s23, 1
    %p240 = por %p238, %p239
    %p242 = scmp.ne.s32.totalorder %s225, %s241
    %p243 = scmp.eq.s32.totalorder %s23, 0
    %p244 = por %p242, %p243
    %s245 = ssub.s32 %s25, %s32
    %p246 = scmp.eq.s32.totalorder %s245, 0
    %s248 = sadd.s32 %s247, 1
    %s249 = scalar_select %p246, %s247, %s248
    %p252 = pneg %p246
    %p253 = scmp.eq.s32.totalorder %s17, 1
    %p254 = por %p252, %p253
    %p255 = scmp.ne.s32.totalorder %s247, %s250
    %p256 = scmp.eq.s32.totalorder %s17, 0
    %p257 = por %p255, %p256
    %p258 = scmp.ne.s32.totalorder %s247, %s250
    %p259 = scmp.eq.s32.totalorder %s22, 1
    %p260 = por %p258, %p259
    %p261 = scmp.ne.s32.totalorder %s250, %s251
    %p262 = scmp.eq.s32.totalorder %s22, 0
    %p263 = por %p261, %p262
    %p264 = scmp.ne.s32.totalorder %s250, %s251
    %p265 = scmp.eq.s32.totalorder %s23, 1
    %p266 = por %p264, %p265
    %p268 = scmp.ne.s32.totalorder %s251, %s267
    %p269 = scmp.eq.s32.totalorder %s23, 0
    %p270 = por %p268, %p269
    %s271 = ssub.s32 %s24, %s36
    %p272 = scmp.eq.s32.totalorder %s271, 0
    %s274 = sadd.s32 %s273, 1
    %s275 = scalar_select %p272, %s273, %s274
    %p278 = pneg %p272
    %p279 = scmp.eq.s32.totalorder %s17, 1
    %p280 = por %p278, %p279
    %p281 = scmp.ne.s32.totalorder %s273, %s276
    %p282 = scmp.eq.s32.totalorder %s17, 0
    %p283 = por %p281, %p282
    %p284 = scmp.ne.s32.totalorder %s273, %s276
    %p285 = scmp.eq.s32.totalorder %s22, 1
    %p286 = por %p284, %p285
    %p287 = scmp.ne.s32.totalorder %s276, %s277
    %p288 = scmp.eq.s32.totalorder %s22, 0
    %p289 = por %p287, %p288
    %p290 = scmp.ne.s32.totalorder %s276, %s277
    %p291 = scmp.eq.s32.totalorder %s23, 1
    %p292 = por %p290, %p291
    %p294 = scmp.ne.s32.totalorder %s277, %s293
    %p295 = scmp.eq.s32.totalorder %s23, 0
    %p296 = por %p294, %p295
    %s297 = ssub.s32 %s25, %s32
    %s298 = ssub.s32 %s24, %s36
    %s299 = sor.u32 %s297, %s298
    %p300 = scmp.eq.s32.totalorder %s299, 0
    %s302 = sadd.s32 %s301, 1
    %s303 = scalar_select %p300, %s301, %s302
    %p306 = pneg %p300
    %p307 = scmp.eq.s32.totalorder %s17, 1
    %p308 = por %p306, %p307
    %p309 = scmp.ne.s32.totalorder %s301, %s304
    %p310 = scmp.eq.s32.totalorder %s17, 0
    %p311 = por %p309, %p310
    %p312 = scmp.ne.s32.totalorder %s301, %s304
    %p313 = scmp.eq.s32.totalorder %s22, 1
    %p314 = por %p312, %p313
    %p315 = scmp.ne.s32.totalorder %s304, %s305
    %p316 = scmp.eq.s32.totalorder %s22, 0
    %p317 = por %p315, %p316
    %p318 = scmp.ne.s32.totalorder %s304, %s305
    %p319 = scmp.eq.s32.totalorder %s23, 1
    %p320 = por %p318, %p319
    %p322 = scmp.ne.s32.totalorder %s305, %s321
    %p323 = scmp.eq.s32.totalorder %s23, 0
    %p324 = por %p322, %p323
    %p325 = scmp.le.s32.totalorder 1, %s17
    %p326 = scmp.lt.s32.totalorder %s17, 3
    %p327 = pnand %p325, %p326
    %p328 = pneg %p327
    // Predicated region
    $region9: #{multi_transformer_encoder.1} parent=5 // pred_check
      _
    $region10: #{multi_transformer_encoder.1} parent=5 // pred_check_branch
      %330 = sbr.rel (%p327) target = $region12
    $region11: #{multi_transformer_encoder.1} parent=5 // pred_region
      %s331 = ssub.s32 %s17, 1
      // Predicated region
      $region13: #{multi_transformer_encoder.1} parent=11 // pred_check
        %p332 = pneg %p55
      $region14: #{multi_transformer_encoder.1} parent=11 // pred_check_branch
        %334 = sbr.rel (%p332) target = $region16
      $region15: #{multi_transformer_encoder.1} parent=11 // pred_region
        %s335 = smul.u32 2, %s26
        %p336 = scmp.lt.s32.totalorder %s335, 1
        %s337 = scalar_select %p336, %s335, 1
        %s338 = smul.addr %s337, 8
        %s339 = scalar_lea.vmem %s0, %s338
        %s340 = smul.u32 2, %s26
      $region16: #{multi_transformer_encoder.1} parent=11 // pred_fallthru
        _
    $region12: #{multi_transformer_encoder.1} parent=5 // pred_fallthru
      _
    %p341 = scmp.lt.s32.totalorder %s17, 2
    // Predicated region
    $region17: #{multi_transformer_encoder.1} parent=5 // pred_check
      %p342 = pneg %p341
    $region18: #{multi_transformer_encoder.1} parent=5 // pred_check_branch
      %344 = sbr.rel (%p342) target = $region20
    $region19: #{multi_transformer_encoder.1} parent=5 // pred_region
      // Predicated region
      $region21: #{multi_transformer_encoder.1} parent=19 // pred_check
        %p345 = pneg %p75
      $region22: #{multi_transformer_encoder.1} parent=19 // pred_check_branch
        %347 = sbr.rel (%p345) target = $region24
      $region23: #{multi_transformer_encoder.1} parent=19 // pred_region
        %p348 = scmp.lt.s32.totalorder %s25, 1
        %s349 = scalar_select %p348, %s25, 1
        %s350 = smul.addr %s349, 4
        %s351 = smul.addr %s350, 8
        %s352 = scalar_lea.vmem %s1, %s351
      $region24: #{multi_transformer_encoder.1} parent=19 // pred_fallthru
        _
      // Predicated region
      $region25: #{multi_transformer_encoder.1} parent=19 // pred_check
        %p353 = pneg %p101
      $region26: #{multi_transformer_encoder.1} parent=19 // pred_check_branch
        %355 = sbr.rel (%p353) target = $region28
      $region27: #{multi_transformer_encoder.1} parent=19 // pred_region
        %p356 = scmp.lt.s32.totalorder %s25, 1
        %s357 = scalar_select %p356, %s25, 1
        %s358 = smul.addr %s357, 4
        %s359 = smul.addr %s358, 8
        %s360 = scalar_lea.vmem %s2, %s359
      $region28: #{multi_transformer_encoder.1} parent=19 // pred_fallthru
        _
      // Predicated region
      $region29: #{multi_transformer_encoder.1} parent=19 // pred_check
        %p361 = pneg %p127
      $region30: #{multi_transformer_encoder.1} parent=19 // pred_check_branch
        %363 = sbr.rel (%p361) target = $region32
      $region31: #{multi_transformer_encoder.1} parent=19 // pred_region
        %p364 = scmp.lt.s32.totalorder %s25, 1
        %s365 = scalar_select %p364, %s25, 1
        %s366 = smul.addr %s365, 4
        %s367 = smul.addr %s366, 8
        %s368 = scalar_lea.vmem %s3, %s367
      $region32: #{multi_transformer_encoder.1} parent=19 // pred_fallthru
        _
      // Predicated region
      $region33: #{multi_transformer_encoder.1} parent=19 // pred_check
        %p369 = pneg %p153
      $region34: #{multi_transformer_encoder.1} parent=19 // pred_check_branch
        %371 = sbr.rel (%p369) target = $region36
      $region35: #{multi_transformer_encoder.1} parent=19 // pred_region
        %p372 = scmp.lt.s32.totalorder %s25, 1
        %s373 = scalar_select %p372, %s25, 1
        %s374 = smul.addr %s373, 4
        %s375 = smul.addr %s374, 8
        %s376 = scalar_lea.vmem %s4, %s375
      $region36: #{multi_transformer_encoder.1} parent=19 // pred_fallthru
        _
      // Predicated region
      $region37: #{multi_transformer_encoder.1} parent=19 // pred_check
        %p377 = pneg %p179
      $region38: #{multi_transformer_encoder.1} parent=19 // pred_check_branch
        %379 = sbr.rel (%p377) target = $region40
      $region39: #{multi_transformer_encoder.1} parent=19 // pred_region
        %p380 = scmp.lt.s32.totalorder %s25, 1
        %s381 = scalar_select %p380, %s25, 1
        %s382 = smul.addr %s381, 4
        %s383 = smul.addr %s382, 8
        %s384 = scalar_lea.vmem %s5, %s383
      $region40: #{multi_transformer_encoder.1} parent=19 // pred_fallthru
        _
      // Predicated region
      $region41: #{multi_transformer_encoder.1} parent=19 // pred_check
        %p385 = pneg %p205
      $region42: #{multi_transformer_encoder.1} parent=19 // pred_check_branch
        %387 = sbr.rel (%p385) target = $region44
      $region43: #{multi_transformer_encoder.1} parent=19 // pred_region
        %p388 = scmp.lt.s32.totalorder %s25, 1
        %s389 = scalar_select %p388, %s25, 1
        %s390 = smul.addr %s389, 16
        %s391 = smul.addr %s390, 8
        %s392 = scalar_lea.vmem %s6, %s391
      $region44: #{multi_transformer_encoder.1} parent=19 // pred_fallthru
        _
      // Predicated region
      $region45: #{multi_transformer_encoder.1} parent=19 // pred_check
        %p393 = pneg %p231
      $region46: #{multi_transformer_encoder.1} parent=19 // pred_check_branch
        %395 = sbr.rel (%p393) target = $region48
      $region47: #{multi_transformer_encoder.1} parent=19 // pred_region
        %p396 = scmp.lt.s32.totalorder %s25, 1
        %s397 = scalar_select %p396, %s25, 1
        %s398 = scalar_lea.vmem %s7, %s397
      $region48: #{multi_transformer_encoder.1} parent=19 // pred_fallthru
        _
      // Predicated region
      $region49: #{multi_transformer_encoder.1} parent=19 // pred_check
        %p399 = pneg %p257
      $region50: #{multi_transformer_encoder.1} parent=19 // pred_check_branch
        %401 = sbr.rel (%p399) target = $region52
      $region51: #{multi_transformer_encoder.1} parent=19 // pred_region
        %p402 = scmp.lt.s32.totalorder %s25, 1
        %s403 = scalar_select %p402, %s25, 1
        %s404 = smul.addr %s403, 2
        %s405 = smul.addr %s404, 8
        %s406 = scalar_lea.vmem %s8, %s405
      $region52: #{multi_transformer_encoder.1} parent=19 // pred_fallthru
        _
    $region20: #{multi_transformer_encoder.1} parent=5 // pred_fallthru
      _
    %p407 = scmp.le.s32.totalorder 1, %s17
    %p408 = scmp.lt.s32.totalorder %s17, 3
    %p409 = pnand %p407, %p408
    %p410 = pneg %p409
    // Predicated region
    $region53: #{multi_transformer_encoder.1} parent=5 // pred_check
      _
    $region54: #{multi_transformer_encoder.1} parent=5 // pred_check_branch
      %412 = sbr.rel (%p409) target = $region56
    $region55: #{multi_transformer_encoder.1} parent=5 // pred_region
      %s413 = ssub.s32 %s17, 1
      %s414 = smul.u32 2, %s26
      %p415 = scmp.lt.s32.totalorder %s414, 1
      %s416 = scalar_select %p415, %s414, 1
      %s417 = smul.addr %s416, 8
      %s418 = scalar_lea.vmem %s0, %s417
      %p419 = pneg %p55
      %p420 = pneg %p52
      %p421 = scmp.lt.s32.totalorder %s27, 1
      %s422 = scalar_select %p421, %s27, 1
      %s423 = smul.addr %s422, 4
      %s424 = smul.addr %s423, 8
      %s425 = scalar_lea.vmem %s1, %s424
      %p426 = pneg %p81
      %p427 = pneg %p78
      %p428 = scmp.lt.s32.totalorder %s27, 1
      %s429 = scalar_select %p428, %s27, 1
      %s430 = smul.addr %s429, 4
      %s431 = smul.addr %s430, 8
      %s432 = scalar_lea.vmem %s2, %s431
      %p433 = pneg %p107
      %p434 = pneg %p104
      %p435 = scmp.lt.s32.totalorder %s27, 1
      %s436 = scalar_select %p435, %s27, 1
      %s437 = smul.addr %s436, 4
      %s438 = smul.addr %s437, 8
      %s439 = scalar_lea.vmem %s3, %s438
      %p440 = pneg %p133
      %p441 = pneg %p130
      %p442 = scmp.lt.s32.totalorder %s27, 1
      %s443 = scalar_select %p442, %s27, 1
      %s444 = smul.addr %s443, 4
      %s445 = smul.addr %s444, 8
      %s446 = scalar_lea.vmem %s4, %s445
      %p447 = pneg %p159
      %p448 = pneg %p156
      %p449 = scmp.lt.s32.totalorder %s27, 1
      %s450 = scalar_select %p449, %s27, 1
      %s451 = smul.addr %s450, 4
      %s452 = smul.addr %s451, 8
      %s453 = scalar_lea.vmem %s5, %s452
      %p454 = pneg %p185
      %p455 = pneg %p182
      %p456 = scmp.lt.s32.totalorder %s27, 1
      %s457 = scalar_select %p456, %s27, 1
      %s458 = smul.addr %s457, 16
      %s459 = smul.addr %s458, 8
      %s460 = scalar_lea.vmem %s6, %s459
      %p461 = pneg %p211
      %p462 = pneg %p208
      %p463 = scmp.lt.s32.totalorder %s27, 1
      %s464 = scalar_select %p463, %s27, 1
      %s465 = scalar_lea.vmem %s7, %s464
      %p466 = pneg %p237
      %p467 = pneg %p234
      %p468 = scmp.lt.s32.totalorder %s27, 1
      %s469 = scalar_select %p468, %s27, 1
      %s470 = smul.addr %s469, 2
      %s471 = smul.addr %s470, 8
      %s472 = scalar_lea.vmem %s8, %s471
      %p473 = pneg %p263
      %p474 = pneg %p260
      %p475 = pneg %p289
      %p476 = pneg %p286
      %s477 = smul.u32 2, %s26
      %p478 = scmp.lt.s32.totalorder %s477, 1
      %s479 = scalar_select %p478, %s477, 1
      %s480 = smul.addr %s479, 8
      %s481 = scalar_lea.vmem %s9, %s480
      %p482 = pneg %p317
      %p483 = pneg %p314
      %s484 = smul.u32 2, %s26
      %p485 = scmp.lt.s32.totalorder %s27, 1
      %s486 = scalar_select %p485, %s27, 1
      %p487 = scmp.lt.s32.totalorder %s484, 1
      %s488 = scalar_select %p487, %s484, 1
      %s489 = smul.addr %s486, 2
      %s490 = sadd.s32 %s488, %s489
      %s491 = smul.addr %s490, 8
      %s492 = scalar_lea.vmem %s10, %s491
      %s493 = smul.u32 2, %s26
      %p494 = scmp.lt.s32.totalorder %s493, 1
      %s495 = scalar_select %p494, %s493, 1
      %s496 = smul.addr %s495, 8
      %s497 = scalar_lea.vmem %s0, %s496
      %s498 = smul.u32 2, %s26
      %p499 = scmp.lt.s32.totalorder %s27, 1
      %s500 = scalar_select %p499, %s27, 1
      %s501 = smul.addr %s500, 4
      %s502 = smul.addr %s501, 8
      %s503 = scalar_lea.vmem %s1, %s502
      %p504 = scmp.lt.s32.totalorder %s27, 1
      %s505 = scalar_select %p504, %s27, 1
      %s506 = smul.addr %s505, 4
      %s507 = smul.addr %s506, 8
      %s508 = scalar_lea.vmem %s2, %s507
      %p509 = scmp.lt.s32.totalorder %s27, 1
      %s510 = scalar_select %p509, %s27, 1
      %s511 = smul.addr %s510, 4
      %s512 = smul.addr %s511, 8
      %s513 = scalar_lea.vmem %s3, %s512
      %p514 = scmp.lt.s32.totalorder %s27, 1
      %s515 = scalar_select %p514, %s27, 1
      %s516 = smul.addr %s515, 4
      %s517 = smul.addr %s516, 8
      %s518 = scalar_lea.vmem %s4, %s517
      %p519 = scmp.lt.s32.totalorder %s27, 1
      %s520 = scalar_select %p519, %s27, 1
      %s521 = smul.addr %s520, 4
      %s522 = smul.addr %s521, 8
      %s523 = scalar_lea.vmem %s5, %s522
      %p524 = scmp.lt.s32.totalorder %s27, 1
      %s525 = scalar_select %p524, %s27, 1
      %s526 = smul.addr %s525, 16
      %s527 = smul.addr %s526, 8
      %s528 = scalar_lea.vmem %s6, %s527
      %p529 = scmp.lt.s32.totalorder %s27, 1
      %s530 = scalar_select %p529, %s27, 1
      %s531 = scalar_lea.vmem %s7, %s530
      %p532 = scmp.lt.s32.totalorder %s27, 1
      %s533 = scalar_select %p532, %s27, 1
      %s534 = smul.addr %s533, 2
      %s535 = smul.addr %s534, 8
      %s536 = scalar_lea.vmem %s8, %s535
      %s537 = smul.u32 2, %s26
      %p538 = scmp.lt.s32.totalorder %s537, 1
      %s539 = scalar_select %p538, %s537, 1
      %s540 = smul.addr %s539, 8
      %s541 = scalar_lea.vmem %s9, %s540
      %s542 = smul.u32 2, %s26
      %s543 = smul.u32 2, %s26
      %p544 = scmp.lt.s32.totalorder %s27, 1
      %s545 = scalar_select %p544, %s27, 1
      %p546 = scmp.lt.s32.totalorder %s543, 1
      %s547 = scalar_select %p546, %s543, 1
      %s548 = smul.addr %s545, 2
      %s549 = sadd.s32 %s547, %s548
      %s550 = smul.addr %s549, 8
      %s551 = scalar_lea.vmem %s10, %s550
      %s552 = smul.u32 2, %s26
      %p553 = scmp.eq.s32.totalorder %s27, 0
      // Predicated region
      $region57: #{multi_transformer_encoder.1} parent=55 // pred_check
        %p554 = pneg %p553
      $region58: #{multi_transformer_encoder.1} parent=55 // pred_check_branch
        %556 = sbr.rel (%p554) target = $region60
      $region59: #{multi_transformer_encoder.1} parent=55 // pred_region
        %v557 = vld [vmem:[%s497] sm:$0xff]
        %v558 = vld [vmem:[%s497 + $0x8] sm:$0xff]
        %vm559 = vcmask 261120
        %560 = vst.msk [vmem:[%s541] sm:$0xff] %vm559, %v557
        %561 = vst.msk [vmem:[%s541 + $0x8] sm:$0xff] %vm559, %v558
      $region60: #{multi_transformer_encoder.1} parent=55 // pred_fallthru
        _
      %v562 = vld [vmem:[%s541] sm:$0xff]
      %v563 = vld [vmem:[%s541 + $0x8] sm:$0xff]
      %v564 = vld [vmem:[%s536] sm:$0xff]
      %v565 = vld [vmem:[%s536 + $0x8] sm:$0x1]
      %v566 = vld [vmem:[%s503] sm:$0xff]
      %v567 = vld [vmem:[%s503 + $0x8] sm:$0xff]
      %v568 = vld [vmem:[%s503 + $0x10] sm:$0xff]
      %v569 = vld [vmem:[%s503 + $0x18] sm:$0xff]
      %v570 = vperm.slane %v564, 0
      %vm571 = vcmask 261120
      %v573 = vsel %vm571, %v562, 0
      %v576 = vsel %vm571, %v563, 0
      %578 = vmatpush.msra.mxu0 0.0
      %579 = vmatpush.msra.mxu0 0.0
      %580 = vmatpush.msra.mxu0 0.0
      %581 = vmatpush.msra.mxu0 0.0
      %582 = vmatpush.msra.mxu0 0.0
      %583 = vmatpush.msra.mxu0 0.0
      %584 = vmatpush.msra.mxu0 0.0
      %585 = vmatpush.msra.mxu0 0.0
      %586 = vmatpush.msra.mxu0 0.0
      %587 = vmatpush.msra.mxu0 0.0
      %588 = vmatpush.msra.mxu0 0.0
      %589 = vmatpush.msra.mxu0 0.0
      %590 = vmatpush.msra.mxu0 %v569
      %591 = vmatpush.msra.mxu0 %v568
      %592 = vmatpush.msra.mxu0 %v567
      %593 = vmatpush.msra.mxu0 %v566
      %594 = vmatmul.f32.gmra.mxu0 %v573
      %v595 = vpop.f32.mrf.mxu0
      %v596 = vadd.f32 %v570, %v595
      %597 = vmatmul.f32.gmra.mxu0 %v576
      %v598 = vpop.f32.mrf.mxu0
      %v599 = vadd.f32 %v570, %v598
      %600 = vdwg.mxu0
      %v601 = vmul.f32 %v596, 0.35355338
      %v602 = vmul.f32 %v599, 0.35355338
      %v603 = vld [vmem:[%s508] sm:$0xff]
      %v604 = vld [vmem:[%s508 + $0x8] sm:$0xff]
      %v605 = vld [vmem:[%s508 + $0x10] sm:$0xff]
      %v606 = vld [vmem:[%s508 + $0x18] sm:$0xff]
      %v607 = vperm.slane %v564, 1
      %608 = vmatpush.msra.mxu0 0.0
      %609 = vmatpush.msra.mxu0 0.0
      %610 = vmatpush.msra.mxu0 0.0
      %611 = vmatpush.msra.mxu0 0.0
      %612 = vmatpush.msra.mxu0 0.0
      %613 = vmatpush.msra.mxu0 0.0
      %614 = vmatpush.msra.mxu0 0.0
      %615 = vmatpush.msra.mxu0 0.0
      %616 = vmatpush.msra.mxu0 0.0
      %617 = vmatpush.msra.mxu0 0.0
      %618 = vmatpush.msra.mxu0 0.0
      %619 = vmatpush.msra.mxu0 0.0
      %620 = vmatpush.msra.mxu0 %v606
      %621 = vmatpush.msra.mxu0 %v605
      %622 = vmatpush.msra.mxu0 %v604
      %623 = vmatpush.msra.mxu0 %v603
      %624 = vmatmul.f32.gmra.mxu0 %v573
      %v625 = vpop.f32.mrf.mxu0
      %v626 = vadd.f32 %v607, %v625
      %627 = vmatmul.f32.gmra.mxu0 %v576
      %v628 = vpop.f32.mrf.mxu0
      %v629 = vadd.f32 %v607, %v628
      %630 = vdwg.mxu0
      %v631 = vld [vmem:[%s513] sm:$0xff]
      %v632 = vld [vmem:[%s513 + $0x8] sm:$0xff]
      %v633 = vld [vmem:[%s513 + $0x10] sm:$0xff]
      %v634 = vld [vmem:[%s513 + $0x18] sm:$0xff]
      %v635 = vperm.slane %v564, 2
      %636 = vmatpush.msra.mxu0 0.0
      %637 = vmatpush.msra.mxu0 0.0
      %638 = vmatpush.msra.mxu0 0.0
      %639 = vmatpush.msra.mxu0 0.0
      %640 = vmatpush.msra.mxu0 0.0
      %641 = vmatpush.msra.mxu0 0.0
      %642 = vmatpush.msra.mxu0 0.0
      %643 = vmatpush.msra.mxu0 0.0
      %644 = vmatpush.msra.mxu0 0.0
      %645 = vmatpush.msra.mxu0 0.0
      %646 = vmatpush.msra.mxu0 0.0
      %647 = vmatpush.msra.mxu0 0.0
      %648 = vmatpush.msra.mxu0 %v634
      %649 = vmatpush.msra.mxu0 %v633
      %650 = vmatpush.msra.mxu0 %v632
      %651 = vmatpush.msra.mxu0 %v631
      %652 = vmatmul.f32.gmra.mxu0 %v573
      %v653 = vpop.f32.mrf.mxu0
      %v654 = vadd.f32 %v635, %v653
      %655 = vmatmul.f32.gmra.mxu0 %v576
      %v656 = vpop.f32.mrf.mxu0
      %v657 = vadd.f32 %v635, %v656
      %658 = vdwg.mxu0
      %661 = vrot.lane.b32.xlu0 %v601, 120
      %v662 = vpop.permute.xlu0 %661
      %663 = vrot.lane.b32.xlu0 %v602, 120
      %v664 = vpop.permute.xlu0 %663
      %665 = vrot.lane.b32.xlu0 %v601, 112
      %v666 = vpop.permute.xlu0 %665
      %667 = vrot.lane.b32.xlu0 %v602, 112
      %v668 = vpop.permute.xlu0 %667
      %669 = vrot.lane.b32.xlu0 %v601, 104
      %v670 = vpop.permute.xlu0 %669
      %671 = vrot.lane.b32.xlu0 %v602, 104
      %v672 = vpop.permute.xlu0 %671
      %675 = vrot.lane.b32.xlu0 %v626, 120
      %v676 = vpop.permute.xlu0 %675
      %677 = vrot.lane.b32.xlu0 %v629, 120
      %v678 = vpop.permute.xlu0 %677
      %679 = vrot.lane.b32.xlu0 %v626, 112
      %v680 = vpop.permute.xlu0 %679
      %681 = vrot.lane.b32.xlu0 %v629, 112
      %v682 = vpop.permute.xlu0 %681
      %683 = vrot.lane.b32.xlu0 %v626, 104
      %v684 = vpop.permute.xlu0 %683
      %685 = vrot.lane.b32.xlu0 %v629, 104
      %v686 = vpop.permute.xlu0 %685
      %689 = vrot.lane.b32.xlu0 %v654, 120
      %v690 = vpop.permute.xlu0 %689
      %691 = vrot.lane.b32.xlu0 %v657, 120
      %v692 = vpop.permute.xlu0 %691
      %695 = vrot.lane.b32.xlu0 %v654, 112
      %v696 = vpop.permute.xlu0 %695
      %697 = vrot.lane.b32.xlu0 %v657, 112
      %v698 = vpop.permute.xlu0 %697
      %701 = vrot.lane.b32.xlu0 %v654, 104
      %v702 = vpop.permute.xlu0 %701
      %703 = vrot.lane.b32.xlu0 %v657, 104
      %v704 = vpop.permute.xlu0 %703
      %vm707 = vcmask 64512
      %v708 = vsel %vm707, %v601, 0
      %v710 = vsel %vm707, %v626, 0
      %712 = vmatpush.xpose.msra.mxu0 0.0
      %713 = vmatpush.xpose.msra.mxu0 0.0
      %714 = vmatpush.xpose.msra.mxu0 0.0
      %715 = vmatpush.xpose.msra.mxu0 0.0
      %716 = vmatpush.xpose.msra.mxu0 0.0
      %717 = vmatpush.xpose.msra.mxu0 0.0
      %718 = vmatpush.xpose.msra.mxu0 0.0
      %719 = vmatpush.xpose.msra.mxu0 0.0
      %720 = vmatpush.xpose.msra.mxu0 0.0
      %721 = vmatpush.xpose.msra.mxu0 0.0
      %722 = vmatpush.xpose.msra.mxu0 0.0
      %723 = vmatpush.xpose.msra.mxu0 0.0
      %724 = vmatpush.xpose.msra.mxu0 0.0
      %725 = vmatpush.xpose.msra.mxu0 0.0
      %726 = vmatpush.xpose.msra.mxu0 0.0
      %727 = vmatpush.xpose.msra.mxu0 %v710
      %728 = vmatmul.f32.gmra.mxu0 %v708
      %v729 = vpop.f32.mrf.mxu0
      %v730 = vadd.f32 0.0, %v729
      %731 = vdwg.mxu0
      %v732 = vsel %vm707, %v602, 0
      %v734 = vsel %vm707, %v629, 0
      %736 = vmatpush.xpose.msra.mxu0 0.0
      %737 = vmatpush.xpose.msra.mxu0 0.0
      %738 = vmatpush.xpose.msra.mxu0 0.0
      %739 = vmatpush.xpose.msra.mxu0 0.0
      %740 = vmatpush.xpose.msra.mxu0 0.0
      %741 = vmatpush.xpose.msra.mxu0 0.0
      %742 = vmatpush.xpose.msra.mxu0 0.0
      %743 = vmatpush.xpose.msra.mxu0 0.0
      %744 = vmatpush.xpose.msra.mxu0 0.0
      %745 = vmatpush.xpose.msra.mxu0 0.0
      %746 = vmatpush.xpose.msra.mxu0 0.0
      %747 = vmatpush.xpose.msra.mxu0 0.0
      %748 = vmatpush.xpose.msra.mxu0 0.0
      %749 = vmatpush.xpose.msra.mxu0 0.0
      %750 = vmatpush.xpose.msra.mxu0 0.0
      %751 = vmatpush.xpose.msra.mxu0 %v734
      %752 = vmatmul.f32.gmra.mxu0 %v732
      %v753 = vpop.f32.mrf.mxu0
      %v754 = vadd.f32 0.0, %v753
      %755 = vdwg.mxu0
      %v756 = vsel %vm707, %v662, 0
      %v758 = vsel %vm707, %v676, 0
      %760 = vmatpush.xpose.msra.mxu0 0.0
      %761 = vmatpush.xpose.msra.mxu0 0.0
      %762 = vmatpush.xpose.msra.mxu0 0.0
      %763 = vmatpush.xpose.msra.mxu0 0.0
      %764 = vmatpush.xpose.msra.mxu0 0.0
      %765 = vmatpush.xpose.msra.mxu0 0.0
      %766 = vmatpush.xpose.msra.mxu0 0.0
      %767 = vmatpush.xpose.msra.mxu0 0.0
      %768 = vmatpush.xpose.msra.mxu0 0.0
      %769 = vmatpush.xpose.msra.mxu0 0.0
      %770 = vmatpush.xpose.msra.mxu0 0.0
      %771 = vmatpush.xpose.msra.mxu0 0.0
      %772 = vmatpush.xpose.msra.mxu0 0.0
      %773 = vmatpush.xpose.msra.mxu0 0.0
      %774 = vmatpush.xpose.msra.mxu0 0.0
      %775 = vmatpush.xpose.msra.mxu0 %v758
      %776 = vmatmul.f32.gmra.mxu0 %v756
      %v777 = vpop.f32.mrf.mxu0
      %v778 = vadd.f32 0.0, %v777
      %779 = vdwg.mxu0
      %v780 = vsel %vm707, %v664, 0
      %v782 = vsel %vm707, %v678, 0
      %784 = vmatpush.xpose.msra.mxu0 0.0
      %785 = vmatpush.xpose.msra.mxu0 0.0
      %786 = vmatpush.xpose.msra.mxu0 0.0
      %787 = vmatpush.xpose.msra.mxu0 0.0
      %788 = vmatpush.xpose.msra.mxu0 0.0
      %789 = vmatpush.xpose.msra.mxu0 0.0
      %790 = vmatpush.xpose.msra.mxu0 0.0
      %791 = vmatpush.xpose.msra.mxu0 0.0
      %792 = vmatpush.xpose.msra.mxu0 0.0
      %793 = vmatpush.xpose.msra.mxu0 0.0
      %794 = vmatpush.xpose.msra.mxu0 0.0
      %795 = vmatpush.xpose.msra.mxu0 0.0
      %796 = vmatpush.xpose.msra.mxu0 0.0
      %797 = vmatpush.xpose.msra.mxu0 0.0
      %798 = vmatpush.xpose.msra.mxu0 0.0
      %799 = vmatpush.xpose.msra.mxu0 %v782
      %800 = vmatmul.f32.gmra.mxu0 %v780
      %v801 = vpop.f32.mrf.mxu0
      %v802 = vadd.f32 0.0, %v801
      %803 = vdwg.mxu0
      %v804 = vsel %vm707, %v666, 0
      %v806 = vsel %vm707, %v680, 0
      %808 = vmatpush.xpose.msra.mxu0 0.0
      %809 = vmatpush.xpose.msra.mxu0 0.0
      %810 = vmatpush.xpose.msra.mxu0 0.0
      %811 = vmatpush.xpose.msra.mxu0 0.0
      %812 = vmatpush.xpose.msra.mxu0 0.0
      %813 = vmatpush.xpose.msra.mxu0 0.0
      %814 = vmatpush.xpose.msra.mxu0 0.0
      %815 = vmatpush.xpose.msra.mxu0 0.0
      %816 = vmatpush.xpose.msra.mxu0 0.0
      %817 = vmatpush.xpose.msra.mxu0 0.0
      %818 = vmatpush.xpose.msra.mxu0 0.0
      %819 = vmatpush.xpose.msra.mxu0 0.0
      %820 = vmatpush.xpose.msra.mxu0 0.0
      %821 = vmatpush.xpose.msra.mxu0 0.0
      %822 = vmatpush.xpose.msra.mxu0 0.0
      %823 = vmatpush.xpose.msra.mxu0 %v806
      %824 = vmatmul.f32.gmra.mxu0 %v804
      %v825 = vpop.f32.mrf.mxu0
      %v826 = vadd.f32 0.0, %v825
      %827 = vdwg.mxu0
      %v828 = vsel %vm707, %v668, 0
      %v830 = vsel %vm707, %v682, 0
      %832 = vmatpush.xpose.msra.mxu0 0.0
      %833 = vmatpush.xpose.msra.mxu0 0.0
      %834 = vmatpush.xpose.msra.mxu0 0.0
      %835 = vmatpush.xpose.msra.mxu0 0.0
      %836 = vmatpush.xpose.msra.mxu0 0.0
      %837 = vmatpush.xpose.msra.mxu0 0.0
      %838 = vmatpush.xpose.msra.mxu0 0.0
      %839 = vmatpush.xpose.msra.mxu0 0.0
      %840 = vmatpush.xpose.msra.mxu0 0.0
      %841 = vmatpush.xpose.msra.mxu0 0.0
      %842 = vmatpush.xpose.msra.mxu0 0.0
      %843 = vmatpush.xpose.msra.mxu0 0.0
      %844 = vmatpush.xpose.msra.mxu0 0.0
      %845 = vmatpush.xpose.msra.mxu0 0.0
      %846 = vmatpush.xpose.msra.mxu0 0.0
      %847 = vmatpush.xpose.msra.mxu0 %v830
      %848 = vmatmul.f32.gmra.mxu0 %v828
      %v849 = vpop.f32.mrf.mxu0
      %v850 = vadd.f32 0.0, %v849
      %851 = vdwg.mxu0
      %v852 = vsel %vm707, %v670, 0
      %v854 = vsel %vm707, %v684, 0
      %856 = vmatpush.xpose.msra.mxu0 0.0
      %857 = vmatpush.xpose.msra.mxu0 0.0
      %858 = vmatpush.xpose.msra.mxu0 0.0
      %859 = vmatpush.xpose.msra.mxu0 0.0
      %860 = vmatpush.xpose.msra.mxu0 0.0
      %861 = vmatpush.xpose.msra.mxu0 0.0
      %862 = vmatpush.xpose.msra.mxu0 0.0
      %863 = vmatpush.xpose.msra.mxu0 0.0
      %864 = vmatpush.xpose.msra.mxu0 0.0
      %865 = vmatpush.xpose.msra.mxu0 0.0
      %866 = vmatpush.xpose.msra.mxu0 0.0
      %867 = vmatpush.xpose.msra.mxu0 0.0
      %868 = vmatpush.xpose.msra.mxu0 0.0
      %869 = vmatpush.xpose.msra.mxu0 0.0
      %870 = vmatpush.xpose.msra.mxu0 0.0
      %871 = vmatpush.xpose.msra.mxu0 %v854
      %872 = vmatmul.f32.gmra.mxu0 %v852
      %v873 = vpop.f32.mrf.mxu0
      %v874 = vadd.f32 0.0, %v873
      %875 = vdwg.mxu0
      %v876 = vsel %vm707, %v672, 0
      %v878 = vsel %vm707, %v686, 0
      %880 = vmatpush.xpose.msra.mxu0 0.0
      %881 = vmatpush.xpose.msra.mxu0 0.0
      %882 = vmatpush.xpose.msra.mxu0 0.0
      %883 = vmatpush.xpose.msra.mxu0 0.0
      %884 = vmatpush.xpose.msra.mxu0 0.0
      %885 = vmatpush.xpose.msra.mxu0 0.0
      %886 = vmatpush.xpose.msra.mxu0 0.0
      %887 = vmatpush.xpose.msra.mxu0 0.0
      %888 = vmatpush.xpose.msra.mxu0 0.0
      %889 = vmatpush.xpose.msra.mxu0 0.0
      %890 = vmatpush.xpose.msra.mxu0 0.0
      %891 = vmatpush.xpose.msra.mxu0 0.0
      %892 = vmatpush.xpose.msra.mxu0 0.0
      %893 = vmatpush.xpose.msra.mxu0 0.0
      %894 = vmatpush.xpose.msra.mxu0 0.0
      %895 = vmatpush.xpose.msra.mxu0 %v878
      %896 = vmatmul.f32.gmra.mxu0 %v876
      %v897 = vpop.f32.mrf.mxu0
      %v898 = vadd.f32 0.0, %v897
      %899 = vdwg.mxu0
      %v900 = vsel %vm707, %v730, -inf
      %901 = vmax.xlane.f32.xlu0 %v900
      %v902 = vpop.xlane.xlu0 %901
      %v903 = vsel %vm707, %v754, -inf
      %904 = vmax.xlane.f32.xlu0 %v903
      %v905 = vpop.xlane.xlu0 %904
      %v906 = vsel %vm707, %v778, -inf
      %907 = vmax.xlane.f32.xlu0 %v906
      %v908 = vpop.xlane.xlu0 %907
      %v909 = vsel %vm707, %v802, -inf
      %910 = vmax.xlane.f32.xlu0 %v909
      %v911 = vpop.xlane.xlu0 %910
      %v912 = vsel %vm707, %v826, -inf
      %913 = vmax.xlane.f32.xlu0 %v912
      %v914 = vpop.xlane.xlu0 %913
      %v915 = vsel %vm707, %v850, -inf
      %916 = vmax.xlane.f32.xlu0 %v915
      %v917 = vpop.xlane.xlu0 %916
      %v918 = vsel %vm707, %v874, -inf
      %919 = vmax.xlane.f32.xlu0 %v918
      %v920 = vpop.xlane.xlu0 %919
      %v921 = vsel %vm707, %v898, -inf
      %922 = vmax.xlane.f32.xlu0 %v921
      %v923 = vpop.xlane.xlu0 %922
      %v924 = vsub.f32 %v730, %v902
      %v925 = vsub.f32 %v754, %v905
      %v926 = vsub.f32 %v778, %v908
      %v927 = vsub.f32 %v802, %v911
      %v928 = vsub.f32 %v826, %v914
      %v929 = vsub.f32 %v850, %v917
      %v930 = vsub.f32 %v874, %v920
      %v931 = vsub.f32 %v898, %v923
      %v932 = vmul.f32 %v924, 1.442695
      %v933 = vpow.pop %v932
      %v934 = vmul.f32 %v925, 1.442695
      %v935 = vpow.pop %v934
      %v936 = vmul.f32 %v926, 1.442695
      %v937 = vpow.pop %v936
      %v938 = vmul.f32 %v927, 1.442695
      %v939 = vpow.pop %v938
      %v940 = vmul.f32 %v928, 1.442695
      %v941 = vpow.pop %v940
      %v942 = vmul.f32 %v929, 1.442695
      %v943 = vpow.pop %v942
      %v944 = vmul.f32 %v930, 1.442695
      %v945 = vpow.pop %v944
      %v946 = vmul.f32 %v931, 1.442695
      %v947 = vpow.pop %v946
      %v948 = vsel %vm707, %v933, 0.0
      %949 = vadd.xlane.f32.xlu0 %v948
      %v950 = vpop.xlane.xlu0 %949
      %v951 = vsel %vm707, %v935, 0.0
      %952 = vadd.xlane.f32.xlu0 %v951
      %v953 = vpop.xlane.xlu0 %952
      %v954 = vsel %vm707, %v937, 0.0
      %955 = vadd.xlane.f32.xlu0 %v954
      %v956 = vpop.xlane.xlu0 %955
      %v957 = vsel %vm707, %v939, 0.0
      %958 = vadd.xlane.f32.xlu0 %v957
      %v959 = vpop.xlane.xlu0 %958
      %v960 = vsel %vm707, %v941, 0.0
      %961 = vadd.xlane.f32.xlu0 %v960
      %v962 = vpop.xlane.xlu0 %961
      %v963 = vsel %vm707, %v943, 0.0
      %964 = vadd.xlane.f32.xlu0 %v963
      %v965 = vpop.xlane.xlu0 %964
      %v966 = vsel %vm707, %v945, 0.0
      %967 = vadd.xlane.f32.xlu0 %v966
      %v968 = vpop.xlane.xlu0 %967
      %v969 = vsel %vm707, %v947, 0.0
      %970 = vadd.xlane.f32.xlu0 %v969
      %v971 = vpop.xlane.xlu0 %970
      %v972 = vrcp.pop %v950
      %v973 = vrcp.pop %v953
      %v974 = vrcp.pop %v956
      %v975 = vrcp.pop %v959
      %v976 = vrcp.pop %v962
      %v977 = vrcp.pop %v965
      %v978 = vrcp.pop %v968
      %v979 = vrcp.pop %v971
      %v980 = vmul.f32 %v950, %v972
      %v981 = vmul.f32 %v953, %v973
      %v982 = vmul.f32 %v956, %v974
      %v983 = vmul.f32 %v959, %v975
      %v984 = vmul.f32 %v962, %v976
      %v985 = vmul.f32 %v965, %v977
      %v986 = vmul.f32 %v968, %v978
      %v987 = vmul.f32 %v971, %v979
      %v988 = vsub.f32 2.0, %v980
      %v989 = vsub.f32 2.0, %v981
      %v990 = vsub.f32 2.0, %v982
      %v991 = vsub.f32 2.0, %v983
      %v992 = vsub.f32 2.0, %v984
      %v993 = vsub.f32 2.0, %v985
      %v994 = vsub.f32 2.0, %v986
      %v995 = vsub.f32 2.0, %v987
      %v996 = vmul.f32 %v972, %v988
      %v997 = vmul.f32 %v973, %v989
      %v998 = vmul.f32 %v974, %v990
      %v999 = vmul.f32 %v975, %v991
      %v1000 = vmul.f32 %v976, %v992
      %v1001 = vmul.f32 %v977, %v993
      %v1002 = vmul.f32 %v978, %v994
      %v1003 = vmul.f32 %v979, %v995
      %v1004 = vmul.f32 %v933, %v996
      %v1005 = vmul.f32 %v935, %v997
      %v1006 = vmul.f32 %v937, %v998
      %v1007 = vmul.f32 %v939, %v999
      %v1008 = vmul.f32 %v941, %v1000
      %v1009 = vmul.f32 %v943, %v1001
      %v1010 = vmul.f32 %v945, %v1002
      %v1011 = vmul.f32 %v947, %v1003
      %v1012 = vsel %vm707, %v1004, 0.0
      %v1013 = vsel %vm707, %v1006, 0.0
      %v1014 = vadd.f32 %v1012, %v1013
      %v1015 = vsel %vm707, %v1008, 0.0
      %v1016 = vadd.f32 %v1014, %v1015
      %v1017 = vsel %vm707, %v1010, 0.0
      %v1018 = vadd.f32 %v1016, %v1017
      %v1019 = vsel %vm707, %v1005, 0.0
      %v1020 = vsel %vm707, %v1007, 0.0
      %v1021 = vadd.f32 %v1019, %v1020
      %v1022 = vsel %vm707, %v1009, 0.0
      %v1023 = vadd.f32 %v1021, %v1022
      %v1024 = vsel %vm707, %v1011, 0.0
      %v1025 = vadd.f32 %v1023, %v1024
      %v1026 = vrcp.pop 4.0
      %v1027 = vmul.f32 4.0, %v1026
      %v1028 = vsub.f32 1.0, %v1027
      %v1029 = vmul.f32 %v1026, %v1028
      %v1030 = vadd.f32 %v1026, %v1029
      %vm1031 = vweird.f32 %v1026
      %v1032 = vsel %vm1031, %v1026, %v1030
      %v1033 = vmul.f32 %v1018, %v1032
      %v1034 = vmul.f32 %v1025, %v1032
      %1035 = vst.msk [vmem:[%s551] sm:$0xff] %vm707, %v1033
      %1036 = vst.msk [vmem:[%s551 + $0x8] sm:$0xff] %vm707, %v1034
      %v1038 = vsel %vm707, %v1004, 0
      %1040 = vmatpush.msra.mxu0 0.0
      %1041 = vmatpush.msra.mxu0 0.0
      %1042 = vmatpush.msra.mxu0 0.0
      %1043 = vmatpush.msra.mxu0 0.0
      %1044 = vmatpush.msra.mxu0 0.0
      %1045 = vmatpush.msra.mxu0 0.0
      %1046 = vmatpush.msra.mxu0 0.0
      %1047 = vmatpush.msra.mxu0 0.0
      %1048 = vmatpush.msra.mxu0 0.0
      %1049 = vmatpush.msra.mxu0 0.0
      %1050 = vmatpush.msra.mxu0 0.0
      %1051 = vmatpush.msra.mxu0 0.0
      %1052 = vmatpush.msra.mxu0 0.0
      %1053 = vmatpush.msra.mxu0 0.0
      %1054 = vmatpush.msra.mxu0 0.0
      %1055 = vmatpush.msra.mxu0 %v654
      %1056 = vmatmul.f32.gmra.mxu0 %v1038
      %v1057 = vpop.f32.mrf.mxu0
      %v1058 = vadd.f32 0.0, %v1057
      %1059 = vdwg.mxu0
      %v1061 = vsel %vm707, %v1005, 0
      %1063 = vmatpush.msra.mxu0 0.0
      %1064 = vmatpush.msra.mxu0 0.0
      %1065 = vmatpush.msra.mxu0 0.0
      %1066 = vmatpush.msra.mxu0 0.0
      %1067 = vmatpush.msra.mxu0 0.0
      %1068 = vmatpush.msra.mxu0 0.0
      %1069 = vmatpush.msra.mxu0 0.0
      %1070 = vmatpush.msra.mxu0 0.0
      %1071 = vmatpush.msra.mxu0 0.0
      %1072 = vmatpush.msra.mxu0 0.0
      %1073 = vmatpush.msra.mxu0 0.0
      %1074 = vmatpush.msra.mxu0 0.0
      %1075 = vmatpush.msra.mxu0 0.0
      %1076 = vmatpush.msra.mxu0 0.0
      %1077 = vmatpush.msra.mxu0 0.0
      %1078 = vmatpush.msra.mxu0 %v657
      %1079 = vmatmul.f32.gmra.mxu0 %v1061
      %v1080 = vpop.f32.mrf.mxu0
      %v1081 = vadd.f32 0.0, %v1080
      %1082 = vdwg.mxu0
      %v1084 = vsel %vm707, %v1006, 0
      %1086 = vmatpush.msra.mxu0 0.0
      %1087 = vmatpush.msra.mxu0 0.0
      %1088 = vmatpush.msra.mxu0 0.0
      %1089 = vmatpush.msra.mxu0 0.0
      %1090 = vmatpush.msra.mxu0 0.0
      %1091 = vmatpush.msra.mxu0 0.0
      %1092 = vmatpush.msra.mxu0 0.0
      %1093 = vmatpush.msra.mxu0 0.0
      %1094 = vmatpush.msra.mxu0 0.0
      %1095 = vmatpush.msra.mxu0 0.0
      %1096 = vmatpush.msra.mxu0 0.0
      %1097 = vmatpush.msra.mxu0 0.0
      %1098 = vmatpush.msra.mxu0 0.0
      %1099 = vmatpush.msra.mxu0 0.0
      %1100 = vmatpush.msra.mxu0 0.0
      %1101 = vmatpush.msra.mxu0 %v690
      %1102 = vmatmul.f32.gmra.mxu0 %v1084
      %v1103 = vpop.f32.mrf.mxu0
      %v1104 = vadd.f32 0.0, %v1103
      %1105 = vdwg.mxu0
      %v1107 = vsel %vm707, %v1007, 0
      %1109 = vmatpush.msra.mxu0 0.0
      %1110 = vmatpush.msra.mxu0 0.0
      %1111 = vmatpush.msra.mxu0 0.0
      %1112 = vmatpush.msra.mxu0 0.0
      %1113 = vmatpush.msra.mxu0 0.0
      %1114 = vmatpush.msra.mxu0 0.0
      %1115 = vmatpush.msra.mxu0 0.0
      %1116 = vmatpush.msra.mxu0 0.0
      %1117 = vmatpush.msra.mxu0 0.0
      %1118 = vmatpush.msra.mxu0 0.0
      %1119 = vmatpush.msra.mxu0 0.0
      %1120 = vmatpush.msra.mxu0 0.0
      %1121 = vmatpush.msra.mxu0 0.0
      %1122 = vmatpush.msra.mxu0 0.0
      %1123 = vmatpush.msra.mxu0 0.0
      %1124 = vmatpush.msra.mxu0 %v692
      %1125 = vmatmul.f32.gmra.mxu0 %v1107
      %v1126 = vpop.f32.mrf.mxu0
      %v1127 = vadd.f32 0.0, %v1126
      %1128 = vdwg.mxu0
      %v1130 = vsel %vm707, %v1008, 0
      %1132 = vmatpush.msra.mxu0 0.0
      %1133 = vmatpush.msra.mxu0 0.0
      %1134 = vmatpush.msra.mxu0 0.0
      %1135 = vmatpush.msra.mxu0 0.0
      %1136 = vmatpush.msra.mxu0 0.0
      %1137 = vmatpush.msra.mxu0 0.0
      %1138 = vmatpush.msra.mxu0 0.0
      %1139 = vmatpush.msra.mxu0 0.0
      %1140 = vmatpush.msra.mxu0 0.0
      %1141 = vmatpush.msra.mxu0 0.0
      %1142 = vmatpush.msra.mxu0 0.0
      %1143 = vmatpush.msra.mxu0 0.0
      %1144 = vmatpush.msra.mxu0 0.0
      %1145 = vmatpush.msra.mxu0 0.0
      %1146 = vmatpush.msra.mxu0 0.0
      %1147 = vmatpush.msra.mxu0 %v696
      %1148 = vmatmul.f32.gmra.mxu0 %v1130
      %v1149 = vpop.f32.mrf.mxu0
      %v1150 = vadd.f32 0.0, %v1149
      %1151 = vdwg.mxu0
      %v1153 = vsel %vm707, %v1009, 0
      %1155 = vmatpush.msra.mxu0 0.0
      %1156 = vmatpush.msra.mxu0 0.0
      %1157 = vmatpush.msra.mxu0 0.0
      %1158 = vmatpush.msra.mxu0 0.0
      %1159 = vmatpush.msra.mxu0 0.0
      %1160 = vmatpush.msra.mxu0 0.0
      %1161 = vmatpush.msra.mxu0 0.0
      %1162 = vmatpush.msra.mxu0 0.0
      %1163 = vmatpush.msra.mxu0 0.0
      %1164 = vmatpush.msra.mxu0 0.0
      %1165 = vmatpush.msra.mxu0 0.0
      %1166 = vmatpush.msra.mxu0 0.0
      %1167 = vmatpush.msra.mxu0 0.0
      %1168 = vmatpush.msra.mxu0 0.0
      %1169 = vmatpush.msra.mxu0 0.0
      %1170 = vmatpush.msra.mxu0 %v698
      %1171 = vmatmul.f32.gmra.mxu0 %v1153
      %v1172 = vpop.f32.mrf.mxu0
      %v1173 = vadd.f32 0.0, %v1172
      %1174 = vdwg.mxu0
      %v1176 = vsel %vm707, %v1010, 0
      %1178 = vmatpush.msra.mxu0 0.0
      %1179 = vmatpush.msra.mxu0 0.0
      %1180 = vmatpush.msra.mxu0 0.0
      %1181 = vmatpush.msra.mxu0 0.0
      %1182 = vmatpush.msra.mxu0 0.0
      %1183 = vmatpush.msra.mxu0 0.0
      %1184 = vmatpush.msra.mxu0 0.0
      %1185 = vmatpush.msra.mxu0 0.0
      %1186 = vmatpush.msra.mxu0 0.0
      %1187 = vmatpush.msra.mxu0 0.0
      %1188 = vmatpush.msra.mxu0 0.0
      %1189 = vmatpush.msra.mxu0 0.0
      %1190 = vmatpush.msra.mxu0 0.0
      %1191 = vmatpush.msra.mxu0 0.0
      %1192 = vmatpush.msra.mxu0 0.0
      %1193 = vmatpush.msra.mxu0 %v702
      %1194 = vmatmul.f32.gmra.mxu0 %v1176
      %v1195 = vpop.f32.mrf.mxu0
      %v1196 = vadd.f32 0.0, %v1195
      %1197 = vdwg.mxu0
      %v1199 = vsel %vm707, %v1011, 0
      %1201 = vmatpush.msra.mxu0 0.0
      %1202 = vmatpush.msra.mxu0 0.0
      %1203 = vmatpush.msra.mxu0 0.0
      %1204 = vmatpush.msra.mxu0 0.0
      %1205 = vmatpush.msra.mxu0 0.0
      %1206 = vmatpush.msra.mxu0 0.0
      %1207 = vmatpush.msra.mxu0 0.0
      %1208 = vmatpush.msra.mxu0 0.0
      %1209 = vmatpush.msra.mxu0 0.0
      %1210 = vmatpush.msra.mxu0 0.0
      %1211 = vmatpush.msra.mxu0 0.0
      %1212 = vmatpush.msra.mxu0 0.0
      %1213 = vmatpush.msra.mxu0 0.0
      %1214 = vmatpush.msra.mxu0 0.0
      %1215 = vmatpush.msra.mxu0 0.0
      %1216 = vmatpush.msra.mxu0 %v704
      %1217 = vmatmul.f32.gmra.mxu0 %v1199
      %v1218 = vpop.f32.mrf.mxu0
      %v1219 = vadd.f32 0.0, %v1218
      %1220 = vdwg.mxu0
      %1223 = vrot.lane.b32.xlu0 %v1104, 8
      %v1224 = vpop.permute.xlu0 %1223
      %1225 = vrot.lane.b32.xlu0 %v1127, 8
      %v1226 = vpop.permute.xlu0 %1225
      %1231 = vrot.lane.b32.xlu0 %v1150, 16
      %v1232 = vpop.permute.xlu0 %1231
      %1233 = vrot.lane.b32.xlu0 %v1173, 16
      %v1234 = vpop.permute.xlu0 %1233
      %1239 = vrot.lane.b32.xlu0 %v1196, 24
      %v1240 = vpop.permute.xlu0 %1239
      %1241 = vrot.lane.b32.xlu0 %v1219, 24
      %v1242 = vpop.permute.xlu0 %1241
      %v1245 = vsel %vm707, %v1058, %v1224
      %v1246 = vsel %vm707, %v1081, %v1226
      %vm1247 = vcmask 130048
      %v1248 = vsel %vm1247, %v1245, %v1232
      %v1249 = vsel %vm1247, %v1246, %v1234
      %vm1250 = vcmask 195584
      %v1251 = vsel %vm1250, %v1248, %v1240
      %v1252 = vsel %vm1250, %v1249, %v1242
      %v1253 = vld [vmem:[%s518] sm:$0xff]
      %v1254 = vld [vmem:[%s518 + $0x8] sm:$0xff]
      %v1255 = vld [vmem:[%s518 + $0x10] sm:$0xff]
      %v1256 = vld [vmem:[%s518 + $0x18] sm:$0xff]
      %v1258 = vsel %vm571, %v1251, 0
      %v1261 = vsel %vm571, %v1252, 0
      %1263 = vmatpush.msra.mxu0 0.0
      %1264 = vmatpush.msra.mxu0 0.0
      %1265 = vmatpush.msra.mxu0 0.0
      %1266 = vmatpush.msra.mxu0 0.0
      %1267 = vmatpush.msra.mxu0 0.0
      %1268 = vmatpush.msra.mxu0 0.0
      %1269 = vmatpush.msra.mxu0 0.0
      %1270 = vmatpush.msra.mxu0 0.0
      %1271 = vmatpush.msra.mxu0 0.0
      %1272 = vmatpush.msra.mxu0 0.0
      %1273 = vmatpush.msra.mxu0 0.0
      %1274 = vmatpush.msra.mxu0 0.0
      %1275 = vmatpush.msra.mxu0 %v1256
      %1276 = vmatpush.msra.mxu0 %v1255
      %1277 = vmatpush.msra.mxu0 %v1254
      %1278 = vmatpush.msra.mxu0 %v1253
      %1279 = vmatmul.f32.gmra.mxu0 %v1258
      %v1280 = vpop.f32.mrf.mxu0
      %v1281 = vadd.f32 0.0, %v1280
      %1282 = vmatmul.f32.gmra.mxu0 %v1261
      %v1283 = vpop.f32.mrf.mxu0
      %v1284 = vadd.f32 0.0, %v1283
      %1285 = vdwg.mxu0
      %v1286 = vadd.f32 %v562, %v1281
      %v1287 = vadd.f32 %v563, %v1284
      %v1288 = vperm.slane %v564, 3
      %v1289 = vadd.f32 %v1286, %v1288
      %v1290 = vadd.f32 %v1287, %v1288
      %v1291 = vsel %vm571, %v1289, 0.0
      %1292 = vadd.xlane.f32.xlu0 %v1291
      %v1293 = vpop.xlane.xlu0 %1292
      %v1294 = vsel %vm571, %v1290, 0.0
      %1295 = vadd.xlane.f32.xlu0 %v1294
      %v1296 = vpop.xlane.xlu0 %1295
      %v1297 = vrcp.pop 32.0
      %v1298 = vmul.f32 32.0, %v1297
      %v1299 = vsub.f32 1.0, %v1298
      %v1300 = vmul.f32 %v1297, %v1299
      %v1301 = vadd.f32 %v1297, %v1300
      %vm1302 = vweird.f32 %v1297
      %v1303 = vsel %vm1302, %v1297, %v1301
      %v1304 = vmul.f32 %v1293, %v1303
      %v1305 = vmul.f32 %v1296, %v1303
      %v1306 = vsub.f32 %v1289, %v1304
      %v1307 = vsub.f32 %v1290, %v1305
      %v1308 = vmul.f32 %v1306, %v1306
      %v1309 = vmul.f32 %v1307, %v1307
      %v1310 = vsel %vm571, %v1308, 0.0
      %1311 = vadd.xlane.f32.xlu0 %v1310
      %v1312 = vpop.xlane.xlu0 %1311
      %v1313 = vsel %vm571, %v1309, 0.0
      %1314 = vadd.xlane.f32.xlu0 %v1313
      %v1315 = vpop.xlane.xlu0 %1314
      %v1316 = vmul.f32 %v1312, %v1303
      %v1317 = vmul.f32 %v1315, %v1303
      %v1318 = vadd.f32 %v1316, 1e-05
      %v1319 = vadd.f32 %v1317, 1e-05
      %v1320 = vrsqrt.pop %v1318
      %v1321 = vmul.f32 %v1320, %v1318
      %v1322 = vmul.f32 %v1321, %v1320
      %v1323 = vmul.f32 0.5, %v1322
      %v1324 = vsub.f32 1.5, %v1323
      %v1325 = vmul.f32 %v1320, %v1324
      %vm1326 = vweird.f32 %v1318
      %vm1327 = vweird.f32 %v1320
      %vm1328 = vmor %vm1326, %vm1327
      %v1329 = vsel %vm1328, %v1320, %v1325
      %v1330 = vrsqrt.pop %v1319
      %v1331 = vmul.f32 %v1330, %v1319
      %v1332 = vmul.f32 %v1331, %v1330
      %v1333 = vmul.f32 0.5, %v1332
      %v1334 = vsub.f32 1.5, %v1333
      %v1335 = vmul.f32 %v1330, %v1334
      %vm1336 = vweird.f32 %v1319
      %vm1337 = vweird.f32 %v1330
      %vm1338 = vmor %vm1336, %vm1337
      %v1339 = vsel %vm1338, %v1330, %v1335
      %v1340 = vmul.f32 %v1306, %v1329
      %v1341 = vmul.f32 %v1307, %v1339
      %v1342 = vperm.slane %v564, 5
      %v1343 = vmul.f32 %v1340, %v1342
      %v1344 = vmul.f32 %v1341, %v1342
      %v1345 = vperm.slane %v564, 6
      %v1346 = vadd.f32 %v1343, %v1345
      %v1347 = vadd.f32 %v1344, %v1345
      %v1348 = vld [vmem:[%s523] sm:$0xff]
      %v1349 = vld [vmem:[%s523 + $0x8] sm:$0xff]
      %v1350 = vld [vmem:[%s523 + $0x10] sm:$0xff]
      %v1351 = vld [vmem:[%s523 + $0x18] sm:$0xff]
      %v1352 = vld [vmem:[%s531] sm:$0x1]
      %v1354 = vperm.slane %v1352, 0
      %v1357 = vsel %vm571, %v1346, 0
      %v1360 = vsel %vm571, %v1347, 0
      %1362 = vmatpush.msra.mxu0 0.0
      %1363 = vmatpush.msra.mxu0 0.0
      %1364 = vmatpush.msra.mxu0 0.0
      %1365 = vmatpush.msra.mxu0 0.0
      %1366 = vmatpush.msra.mxu0 0.0
      %1367 = vmatpush.msra.mxu0 0.0
      %1368 = vmatpush.msra.mxu0 0.0
      %1369 = vmatpush.msra.mxu0 0.0
      %1370 = vmatpush.msra.mxu0 0.0
      %1371 = vmatpush.msra.mxu0 0.0
      %1372 = vmatpush.msra.mxu0 0.0
      %1373 = vmatpush.msra.mxu0 0.0
      %1374 = vmatpush.msra.mxu0 %v1351
      %1375 = vmatpush.msra.mxu0 %v1350
      %1376 = vmatpush.msra.mxu0 %v1349
      %1377 = vmatpush.msra.mxu0 %v1348
      %1378 = vmatmul.f32.gmra.mxu0 %v1357
      %v1379 = vpop.f32.mrf.mxu0
      %v1380 = vadd.f32 %v1354, %v1379
      %1381 = vmatmul.f32.gmra.mxu0 %v1360
      %v1382 = vpop.f32.mrf.mxu0
      %v1383 = vadd.f32 %v1354, %v1382
      %1384 = vdwg.mxu0
      %v1385 = vmax.f32 %v1380, 0.0
      %v1386 = vmax.f32 %v1383, 0.0
      %v1387 = vld [vmem:[%s528] sm:$0xff]
      %v1388 = vld [vmem:[%s528 + $0x8] sm:$0xff]
      %v1389 = vld [vmem:[%s528 + $0x10] sm:$0xff]
      %v1390 = vld [vmem:[%s528 + $0x18] sm:$0xff]
      %v1391 = vld [vmem:[%s528 + $0x20] sm:$0xff]
      %v1392 = vld [vmem:[%s528 + $0x28] sm:$0xff]
      %v1393 = vld [vmem:[%s528 + $0x30] sm:$0xff]
      %v1394 = vld [vmem:[%s528 + $0x38] sm:$0xff]
      %v1395 = vld [vmem:[%s528 + $0x40] sm:$0xff]
      %v1396 = vld [vmem:[%s528 + $0x48] sm:$0xff]
      %v1397 = vld [vmem:[%s528 + $0x50] sm:$0xff]
      %v1398 = vld [vmem:[%s528 + $0x58] sm:$0xff]
      %v1399 = vld [vmem:[%s528 + $0x60] sm:$0xff]
      %v1400 = vld [vmem:[%s528 + $0x68] sm:$0xff]
      %v1401 = vld [vmem:[%s528 + $0x70] sm:$0xff]
      %v1402 = vld [vmem:[%s528 + $0x78] sm:$0xff]
      %1403 = vmatpush.msra.mxu0 %v1402
      %1404 = vmatpush.msra.mxu0 %v1401
      %1405 = vmatpush.msra.mxu0 %v1400
      %1406 = vmatpush.msra.mxu0 %v1399
      %1407 = vmatpush.msra.mxu0 %v1398
      %1408 = vmatpush.msra.mxu0 %v1397
      %1409 = vmatpush.msra.mxu0 %v1396
      %1410 = vmatpush.msra.mxu0 %v1395
      %1411 = vmatpush.msra.mxu0 %v1394
      %1412 = vmatpush.msra.mxu0 %v1393
      %1413 = vmatpush.msra.mxu0 %v1392
      %1414 = vmatpush.msra.mxu0 %v1391
      %1415 = vmatpush.msra.mxu0 %v1390
      %1416 = vmatpush.msra.mxu0 %v1389
      %1417 = vmatpush.msra.mxu0 %v1388
      %1418 = vmatpush.msra.mxu0 %v1387
      %1419 = vmatmul.f32.gmra.mxu0 %v1385
      %v1420 = vpop.f32.mrf.mxu0
      %v1421 = vadd.f32 0.0, %v1420
      %1422 = vmatmul.f32.gmra.mxu0 %v1386
      %v1423 = vpop.f32.mrf.mxu0
      %v1424 = vadd.f32 0.0, %v1423
      %1425 = vdwg.mxu0
      %v1426 = vadd.f32 %v1346, %v1421
      %v1427 = vadd.f32 %v1347, %v1424
      %v1428 = vperm.slane %v564, 4
      %v1429 = vadd.f32 %v1426, %v1428
      %v1430 = vadd.f32 %v1427, %v1428
      %v1431 = vsel %vm571, %v1429, 0.0
      %1432 = vadd.xlane.f32.xlu0 %v1431
      %v1433 = vpop.xlane.xlu0 %1432
      %v1434 = vsel %vm571, %v1430, 0.0
      %1435 = vadd.xlane.f32.xlu0 %v1434
      %v1436 = vpop.xlane.xlu0 %1435
      %v1437 = vmul.f32 %v1433, %v1303
      %v1438 = vmul.f32 %v1436, %v1303
      %v1439 = vsub.f32 %v1429, %v1437
      %v1440 = vsub.f32 %v1430, %v1438
      %v1441 = vmul.f32 %v1439, %v1439
      %v1442 = vmul.f32 %v1440, %v1440
      %v1443 = vsel %vm571, %v1441, 0.0
      %1444 = vadd.xlane.f32.xlu0 %v1443
      %v1445 = vpop.xlane.xlu0 %1444
      %v1446 = vsel %vm571, %v1442, 0.0
      %1447 = vadd.xlane.f32.xlu0 %v1446
      %v1448 = vpop.xlane.xlu0 %1447
      %v1449 = vmul.f32 %v1445, %v1303
      %v1450 = vmul.f32 %v1448, %v1303
      %v1451 = vadd.f32 %v1449, 1e-05
      %v1452 = vadd.f32 %v1450, 1e-05
      %v1453 = vrsqrt.pop %v1451
      %v1454 = vmul.f32 %v1453, %v1451
      %v1455 = vmul.f32 %v1454, %v1453
      %v1456 = vmul.f32 0.5, %v1455
      %v1457 = vsub.f32 1.5, %v1456
      %v1458 = vmul.f32 %v1453, %v1457
      %vm1459 = vweird.f32 %v1451
      %vm1460 = vweird.f32 %v1453
      %vm1461 = vmor %vm1459, %vm1460
      %v1462 = vsel %vm1461, %v1453, %v1458
      %v1463 = vrsqrt.pop %v1452
      %v1464 = vmul.f32 %v1463, %v1452
      %v1465 = vmul.f32 %v1464, %v1463
      %v1466 = vmul.f32 0.5, %v1465
      %v1467 = vsub.f32 1.5, %v1466
      %v1468 = vmul.f32 %v1463, %v1467
      %vm1469 = vweird.f32 %v1452
      %vm1470 = vweird.f32 %v1463
      %vm1471 = vmor %vm1469, %vm1470
      %v1472 = vsel %vm1471, %v1463, %v1468
      %v1473 = vmul.f32 %v1439, %v1462
      %v1474 = vmul.f32 %v1440, %v1472
      %v1475 = vperm.slane %v564, 7
      %v1476 = vmul.f32 %v1473, %v1475
      %v1477 = vmul.f32 %v1474, %v1475
      %v1478 = vperm.slane %v565, 0
      %v1479 = vadd.f32 %v1476, %v1478
      %v1480 = vadd.f32 %v1477, %v1478
      %1481 = vst.msk [vmem:[%s541] sm:$0xff] %vm571, %v1479
      %1482 = vst.msk [vmem:[%s541 + $0x8] sm:$0xff] %vm571, %v1480
      %s1483 = smul.u32 2, %s26
      %p1484 = scmp.lt.s32.totalorder %s1483, 1
      %s1485 = scalar_select %p1484, %s1483, 1
      %s1486 = smul.addr %s1485, 8
      %s1487 = scalar_lea.vmem %s9, %s1486
      %s1488 = smul.u32 2, %s26
      %p1489 = scmp.lt.s32.totalorder %s27, 1
      %s1490 = scalar_select %p1489, %s27, 1
      %p1491 = scmp.lt.s32.totalorder %s1488, 1
      %s1492 = scalar_select %p1491, %s1488, 1
      %s1493 = smul.addr %s1490, 2
      %s1494 = sadd.s32 %s1492, %s1493
      %s1495 = smul.addr %s1494, 8
      %s1496 = scalar_lea.vmem %s10, %s1495
      // Predicated region
      $region61: #{multi_transformer_encoder.1} parent=55 // pred_check
        %p1497 = pneg %p286
      $region62: #{multi_transformer_encoder.1} parent=55 // pred_check_branch
        %1499 = sbr.rel (%p1497) target = $region64
      $region63: #{multi_transformer_encoder.1} parent=55 // pred_region
        %s1500 = smul.u32 2, %s26
      $region64: #{multi_transformer_encoder.1} parent=55 // pred_fallthru
        _
      // Predicated region
      $region65: #{multi_transformer_encoder.1} parent=55 // pred_check
        %p1501 = pneg %p314
      $region66: #{multi_transformer_encoder.1} parent=55 // pred_check_branch
        %1503 = sbr.rel (%p1501) target = $region68
      $region67: #{multi_transformer_encoder.1} parent=55 // pred_region
        %s1504 = smul.u32 2, %s26
      $region68: #{multi_transformer_encoder.1} parent=55 // pred_fallthru
        _
      // Predicated region
      $region69: #{multi_transformer_encoder.1} parent=55 // pred_check
        %p1505 = pneg %p286
      $region70: #{multi_transformer_encoder.1} parent=55 // pred_check_branch
        %1507 = sbr.rel (%p1505) target = $region72
      $region71: #{multi_transformer_encoder.1} parent=55 // pred_region
        %s1508 = smul.u32 2, %s26
        %p1509 = scmp.lt.s32.totalorder %s1508, 1
        %s1510 = scalar_select %p1509, %s1508, 1
        %s1511 = smul.addr %s1510, 8
        %s1512 = scalar_lea.vmem %s9, %s1511
      $region72: #{multi_transformer_encoder.1} parent=55 // pred_fallthru
        _
    $region56: #{multi_transformer_encoder.1} parent=5 // pred_fallthru
      _
    %p1513 = scmp.le.s32.totalorder 2, %s17
    // Predicated region
    $region73: #{multi_transformer_encoder.1} parent=5 // pred_check
      %p1514 = pneg %p1513
    $region74: #{multi_transformer_encoder.1} parent=5 // pred_check_branch
      %1516 = sbr.rel (%p1514) target = $region76
    $region75: #{multi_transformer_encoder.1} parent=5 // pred_region
      %s1517 = ssub.s32 %s17, 2
      // Predicated region
      $region77: #{multi_transformer_encoder.1} parent=75 // pred_check
        %p1518 = pneg %p320
      $region78: #{multi_transformer_encoder.1} parent=75 // pred_check_branch
        %1520 = sbr.rel (%p1518) target = $region80
      $region79: #{multi_transformer_encoder.1} parent=75 // pred_region
        %s1521 = smul.u32 2, %s28
        %p1522 = scmp.lt.s32.totalorder %s29, 1
        %s1523 = scalar_select %p1522, %s29, 1
        %p1524 = scmp.lt.s32.totalorder %s1521, 1
        %s1525 = scalar_select %p1524, %s1521, 1
        %s1526 = smul.addr %s1523, 2
        %s1527 = sadd.s32 %s1525, %s1526
        %s1528 = smul.addr %s1527, 8
        %s1529 = scalar_lea.vmem %s10, %s1528
      $region80: #{multi_transformer_encoder.1} parent=75 // pred_fallthru
        _
    $region76: #{multi_transformer_encoder.1} parent=5 // pred_fallthru
      _
  $region6: #{multi_transformer_encoder.1} parent=0 // loop_footer
    %s21 = sadd.s32 1, %s17
  $region7: #{multi_transformer_encoder.1} parent=0 // loop_footer_branch
    %16 = sbr.rel target = $region3
  $region8: #{multi_transformer_encoder.1} parent=0 // loop_exit
    _

</llo_original>
